<compile_context>
chip_gen: v7x
topology: tpu7x:2x2x1
jax: 0.10.0
libtpu: 0.0.40
codegen_flags: <defaults>
</compile_context>

<pallas_src>
import functools

import jax
import jax.numpy as jnp
import numpy as np
from jax.experimental import pallas as pl
from jax.experimental.pallas import tpu as pltpu


# ----------------------------- Pallas kernel ---------------------------------
def spatial_gate_kernel(x_ref, mask_ref, w0_ref, s0_ref, wd1_ref, s1_ref,
                        wd2_ref, s2_ref, wf_ref, bf_ref, out_ref, *, offsets):
    """One block of B merged (branch, batch) samples per grid step.

    x_ref    : (1, Cg, L)    L = B*HW; channels in sublanes, all B samples' pixels in lanes
    mask_ref : (9, Crp, L)   precomputed 0/1 tap-validity masks (also kill cross-sample bleed)
    w0_ref   : (Crp, Cg)     1x1 reduce conv, BN scale folded, Cr zero-padded to Crp
    s0_ref   : (Crp, 1)      folded conv-bias + BN shift
    wd*_ref  : (Crp, 9*Crp)  dilated 3x3 conv, all 9 taps stacked on the contraction axis
    s*_ref   : (Crp, 1)      folded conv-bias + BN shift
    wf_ref   : (Crp, 1)      final 1x1 conv weight (column)
    bf_ref   : (1, 1)        final conv bias
    out_ref  : (1, 1, L)     spatial gate map for the B samples of this block
    """
    L = x_ref.shape[-1]
    cdt = w0_ref.dtype                       # MXU operand dtype (f32, or bf16 if use_bf16)
    x = x_ref[0]                             # (Cg, L)

    # 1x1 reduce conv (single MXU matmul over the Cg contraction) + folded BN + ReLU
    y = jnp.dot(w0_ref[...], x, preferred_element_type=jnp.float32) + s0_ref[...]
    y = jnp.maximum(y, 0.0)                  # (Crp, L) f32

    def dilated_conv_bn_relu(y_f32, wd_ref, s_ref):
        # Build the 9 taps (lane rotation on XLU + precomputed-mask multiply on VPU), stack them
        # along the contraction axis, and contract ONCE on the MXU (K = 9*Crp) -- not 9 micro-dots.
        yc = y_f32.astype(cdt)
        taps = []
        for t, off in enumerate(offsets):
            if off == 0:
                taps.append(yc)                                   # center tap: always in-image
            else:
                rolled = pltpu.roll(yc, shift=(-off) % L, axis=1)
                taps.append(rolled * mask_ref[t])
        taps = jnp.concatenate(taps, axis=0)                      # (9*Crp, L)
        out = jnp.dot(wd_ref[...], taps,
                      preferred_element_type=jnp.float32) + s_ref[...]
        return jnp.maximum(out, 0.0)

    # two dilated 3x3 convs (+ folded BN + ReLU)
    y = dilated_conv_bn_relu(y, wd1_ref, s1_ref)
    y = dilated_conv_bn_relu(y, wd2_ref, s2_ref)

    # final 1x1 conv to one gate channel: per-channel scale + cross-sublane reduce (XLU)
    gate = jnp.sum(wf_ref[...] * y, axis=0, keepdims=True) + bf_ref[...]   # (1, L)
    out_ref[...] = gate.reshape(1, 1, L)


# ----------------------------- wrapper ---------------------------------------
def _choose_samples_per_block(S, bytes_per_sample, max_block_bytes=4 << 20):
    """Merge B samples per grid step: widest lane block within the budget while keeping >=2 grid
    steps (so ("parallel",) shards across both v7x TensorCores; on v5e/v6e the second step only
    costs one ~0.35us per-step overhead)."""
    if S <= 1:
        return 1
    cap = max(1, max_block_bytes // max(bytes_per_sample, 1))
    b = max(1, min(cap, S // 2))
    while b > 1 and S % b != 0:
        b -= 1
    return b


def spatial_gate_pallas(x,
                        w0, b0, g0, be0, m0, v0,
                        wd1, bd1, g1, be1, m1, v1,
                        wd2, bd2, g2, be2, m2, v2,
                        wf, bf,
                        dilation=4, eps=1e-5, use_bf16=False, expand=False):
    """x: (P, N, Cg, H, W) f32 -- PyTorch NCHW stacked over the parallel branches.
    Returns the compact gate (P, N, 1, H, W) by default (PyTorch's expand_as is a broadcast view);
    pass expand=True to materialize the (P, N, Cg, H, W) broadcast."""
    P, N, Cg, H, W = x.shape
    Cr = w0.shape[0]
    HW = H * W
    S = P * N
    Crp = max(8, ((Cr + 7) // 8) * 8)        # pad reduced channels to a full 8-sublane tile
    pad_c = Crp - Cr

    cdt = jnp.bfloat16 if use_bf16 else jnp.float32
    ebytes = 2 if use_bf16 else 4

    # ---- fold inference-mode BN (+ conv bias) into per-channel scale/shift -------------------
    def fold(gamma, beta, mean, var, bias):
        scale = gamma * jax.lax.rsqrt(var + eps)
        shift = (bias - mean) * scale + beta
        return scale, shift

    sc0, sh0 = fold(g0, be0, m0, v0, b0)
    sc1, sh1 = fold(g1, be1, m1, v1, bd1)
    sc2, sh2 = fold(g2, be2, m2, v2, bd2)

    w0_eff = jnp.pad(w0.reshape(Cr, Cg) * sc0[:, None], ((0, pad_c), (0, 0)))    # (Crp, Cg)

    def fold_dilated(wd, scale):
        w = wd * scale[:, None, None, None]                        # (Cr, Cr, 3, 3) OIHW
        w = jnp.transpose(w, (2, 3, 0, 1)).reshape(9, Cr, Cr)      # (t = ky*3+kx, o, i)
        w = jnp.pad(w, ((0, 0), (0, pad_c), (0, pad_c)))           # (9, Crp, Crp), zero pad
        return jnp.transpose(w, (1, 0, 2)).reshape(Crp, 9 * Crp)   # (o, t*Crp + i)

    wd1_eff = fold_dilated(wd1, sc1)
    wd2_eff = fold_dilated(wd2, sc2)

    sh0p = jnp.pad(sh0, (0, pad_c)).reshape(Crp, 1)                # zero shift on padded chans
    sh1p = jnp.pad(sh1, (0, pad_c)).reshape(Crp, 1)
    sh2p = jnp.pad(sh2, (0, pad_c)).reshape(Crp, 1)
    wf_eff = jnp.pad(wf.reshape(Cr), (0, pad_c)).reshape(Crp, 1)
    bf_eff = bf.reshape(1, 1)

    if use_bf16:
        w0_eff = w0_eff.astype(cdt)
        wd1_eff = wd1_eff.astype(cdt)
        wd2_eff = wd2_eff.astype(cdt)

    # ---- merge B samples per grid step into one lane block L = B*HW --------------------------
    B = _choose_samples_per_block(S, Cg * HW * ebytes)
    G = S // B
    L = B * HW

    # NCHW flattened & blocked: (G, Cg, B*HW); channels -> sublanes, pixels of B samples -> lanes.
    x2 = x.reshape(G, B, Cg, HW).transpose(0, 2, 1, 3).reshape(G, Cg, L).astype(cdt)

    # ---- precomputed tap offsets + validity masks (hoisted out of the kernel, loaded once) ----
    lane = np.arange(L)
    p = lane % HW                                       # per-sample pixel index
    h_idx, w_idx = p // W, p % W
    offsets, masks = [], []
    for ky in range(3):
        dy = (ky - 1) * dilation
        for kx in range(3):
            dx = (kx - 1) * dilation
            offsets.append(dy * W + dx)
            masks.append((h_idx + dy >= 0) & (h_idx + dy < H) &
                         (w_idx + dx >= 0) & (w_idx + dx < W))
    mask_np = np.broadcast_to(np.stack(masks, 0).astype(np.float32)[:, None, :],
                              (9, Crp, L)).copy()       # pre-broadcast to Crp sublanes
    mask = jnp.asarray(mask_np, dtype=cdt)

    # ---- honest VMEM budget from the actual merged-block footprint (cap 48 MiB) --------------
    in_block = Cg * L * ebytes
    out_block = L * 4
    mask_bytes = 9 * Crp * L * ebytes
    param_bytes = (Crp * Cg + 2 * Crp * 9 * Crp) * ebytes + (4 * Crp + 1) * 4
    scratch_bytes = (2 * 9 * Crp * L + 4 * Crp * L + Cg * L) * 4      # taps + rolled temps + y
    footprint = 2 * (in_block + out_block) + 2 * mask_bytes + 2 * param_bytes + scratch_bytes
    vmem_limit = int(min(max(2 * footprint, 4 << 20), 48 << 20))

    grid_spec = pltpu.PrefetchScalarGridSpec(
        num_scalar_prefetch=0,
        grid=(G,),
        in_specs=[
            pl.BlockSpec((1, Cg, L), lambda g: (g, 0, 0)),
            pl.BlockSpec((9, Crp, L), lambda g: (0, 0, 0)),     # constant index: loaded once
            pl.BlockSpec((Crp, Cg), lambda g: (0, 0)),
            pl.BlockSpec((Crp, 1), lambda g: (0, 0)),
            pl.BlockSpec((Crp, 9 * Crp), lambda g: (0, 0)),
            pl.BlockSpec((Crp, 1), lambda g: (0, 0)),
            pl.BlockSpec((Crp, 9 * Crp), lambda g: (0, 0)),
            pl.BlockSpec((Crp, 1), lambda g: (0, 0)),
            pl.BlockSpec((Crp, 1), lambda g: (0, 0)),
            pl.BlockSpec((1, 1), lambda g: (0, 0)),
        ],
        out_specs=pl.BlockSpec((1, 1, L), lambda g: (g, 0, 0)),
    )

    gate = pl.pallas_call(
        functools.partial(spatial_gate_kernel, offsets=tuple(offsets)),
        out_shape=jax.ShapeDtypeStruct((G, 1, L), jnp.float32),
        grid_spec=grid_spec,
        compiler_params=pltpu.CompilerParams(
            dimension_semantics=("parallel",),
            vmem_limit_bytes=vmem_limit),
    )(x2, mask, w0_eff, sh0p, wd1_eff, sh1p, wd2_eff, sh2p, wf_eff, bf_eff)

    gate = gate.reshape(G, B, HW).reshape(P, N, 1, H, W)
    if expand:
        # expand_as: only materialize the Cg-times-larger broadcast if the caller insists --
        # it would otherwise dominate the op's HBM traffic.
        return jnp.broadcast_to(gate, (P, N, Cg, H, W))
    return gate


# ----------------------------- pure-JAX reference -----------------------------
def _conv_ref(x, w, b, dilation=1, padding=0):
    y = jax.lax.conv_general_dilated(
        x, w, window_strides=(1, 1),
        padding=[(padding, padding), (padding, padding)],
        rhs_dilation=(dilation, dilation),
        dimension_numbers=("NCHW", "OIHW", "NCHW"))
    return y + b[None, :, None, None]


def _bn_ref(y, gamma, beta, mean, var, eps):
    inv = gamma * jax.lax.rsqrt(var + eps)
    return (y - mean[None, :, None, None]) * inv[None, :, None, None] + beta[None, :, None, None]


def spatial_gate_reference(x,
                           w0, b0, g0, be0, m0, v0,
                           wd1, bd1, g1, be1, m1, v1,
                           wd2, bd2, g2, be2, m2, v2,
                           wf, bf, dilation=4, eps=1e-5):
    P = x.shape[0]
    outs = []
    for br in range(P):
        xb = x[br]
        y = jax.nn.relu(_bn_ref(_conv_ref(xb, w0, b0), g0, be0, m0, v0, eps))
        y = jax.nn.relu(_bn_ref(_conv_ref(y, wd1, bd1, dilation, dilation), g1, be1, m1, v1, eps))
        y = jax.nn.relu(_bn_ref(_conv_ref(y, wd2, bd2, dilation, dilation), g2, be2, m2, v2, eps))
        gate = _conv_ref(y, wf, bf)                      # (N, 1, H, W)
        outs.append(jnp.broadcast_to(gate, xb.shape))    # expand_as (PyTorch return)
    return jnp.stack(outs)


if __name__ == "__main__":
    # num_parallel=2, batch=2, gate_channel=64, reduction_ratio=16 (-> 4 reduced channels),
    # spatial 16x16, dilation_val=4, dilation_conv_num=2.
    P, N, Cg, H, W = 2, 2, 64, 16, 16
    RED, DIL = 16, 4
    Cr = Cg // RED
    EPS = 1e-5

    key = jax.random.PRNGKey(0)
    ks = jax.random.split(key, 9)
    x = jax.random.normal(ks[0], (P, N, Cg, H, W), jnp.float32)

    w0 = jax.random.normal(ks[1], (Cr, Cg, 1, 1), jnp.float32) * 0.2   # gate_s_conv_reduce0
    b0 = jax.random.normal(ks[2], (Cr,), jnp.float32) * 0.1
    wd1 = jax.random.normal(ks[3], (Cr, Cr, 3, 3), jnp.float32) * 0.2  # gate_s_conv_di_0
    bd1 = jax.random.normal(ks[4], (Cr,), jnp.float32) * 0.1
    wd2 = jax.random.normal(ks[5], (Cr, Cr, 3, 3), jnp.float32) * 0.2  # gate_s_conv_di_1
    bd2 = jax.random.normal(ks[6], (Cr,), jnp.float32) * 0.1
    wf = jax.random.normal(ks[7], (1, Cr, 1, 1), jnp.float32) * 0.2    # gate_s_conv_final
    bf = jax.random.normal(ks[8], (1,), jnp.float32) * 0.1

    # Deterministic BN params (shared across branches -- ModuleParallel wraps ONE BatchNorm2d).
    g0 = jnp.linspace(0.5, 1.5, Cr).astype(jnp.float32)
    be0 = jnp.linspace(-0.2, 0.2, Cr).astype(jnp.float32)
    m0 = jnp.linspace(-0.1, 0.1, Cr).astype(jnp.float32)
    v0 = jnp.linspace(0.5, 1.5, Cr).astype(jnp.float32)
    g1 = jnp.linspace(1.2, 0.4, Cr).astype(jnp.float32)
    be1 = jnp.linspace(0.1, -0.1, Cr).astype(jnp.float32)
    m1 = jnp.linspace(0.05, -0.05, Cr).astype(jnp.float32)
    v1 = jnp.linspace(1.5, 0.5, Cr).astype(jnp.float32)
    g2 = jnp.linspace(0.8, 1.1, Cr).astype(jnp.float32)
    be2 = jnp.linspace(-0.05, 0.05, Cr).astype(jnp.float32)
    m2 = jnp.zeros((Cr,), jnp.float32)
    v2 = jnp.ones((Cr,), jnp.float32)

    run = jax.jit(functools.partial(spatial_gate_pallas, dilation=DIL, eps=EPS))
    out = run(x, w0, b0, g0, be0, m0, v0,
              wd1, bd1, g1, be1, m1, v1,
              wd2, bd2, g2, be2, m2, v2,
              wf, bf)                                    # compact gate (P, N, 1, H, W)
    out = jax.block_until_ready(out)

    ref = spatial_gate_reference(x, w0, b0, g0, be0, m0, v0,
                                 wd1, bd1, g1, be1, m1, v1,
                                 wd2, bd2, g2, be2, m2, v2,
                                 wf, bf, dilation=DIL, eps=EPS)
    ref = jax.block_until_ready(ref)

    # Verify the full module semantics: the compact gate broadcast (expand_as is a view) must
    # match the reference's expanded output.
    out_expanded = np.broadcast_to(np.asarray(out), (P, N, Cg, H, W))
    np.testing.assert_allclose(out_expanded, np.asarray(ref), rtol=1e-4, atol=1e-4)
    print("KERNEL_OK")
</pallas_src>

<mosaic_0001>
module attributes {stable_mosaic.version = 11 : i64} {
  func.func @spatial_gate_kernel(%arg0: i32, %arg1: memref<1x64x512xf32, #tpu.memory_space<vmem>>, %arg2: memref<9x8x512xf32, #tpu.memory_space<vmem>>, %arg3: memref<8x64xf32, #tpu.memory_space<vmem>>, %arg4: memref<8x1xf32, #tpu.memory_space<vmem>>, %arg5: memref<8x72xf32, #tpu.memory_space<vmem>>, %arg6: memref<8x1xf32, #tpu.memory_space<vmem>>, %arg7: memref<8x72xf32, #tpu.memory_space<vmem>>, %arg8: memref<8x1xf32, #tpu.memory_space<vmem>>, %arg9: memref<8x1xf32, #tpu.memory_space<vmem>>, %arg10: memref<1x1xf32, #tpu.memory_space<vmem>>, %arg11: memref<1x1x512xf32, #tpu.memory_space<vmem>>) attributes {dimension_semantics = [#tpu.dimension_semantics<parallel>], iteration_bounds = array<i64: 2>, scalar_prefetch = 0 : i64, scratch_operands = 0 : i64, tpu.core_type = #tpu.core_type<tc>, window_params = [{transform_indices = @transform_0, window_bounds = array<i64: 1, 64, 512>}, {pipeline_mode = #tpu.pipeline_mode<synchronous>, transform_indices = @transform_1, window_bounds = array<i64: 9, 8, 512>}, {pipeline_mode = #tpu.pipeline_mode<synchronous>, transform_indices = @transform_2, window_bounds = array<i64: 8, 64>}, {pipeline_mode = #tpu.pipeline_mode<synchronous>, transform_indices = @transform_3, window_bounds = array<i64: 8, 1>}, {pipeline_mode = #tpu.pipeline_mode<synchronous>, transform_indices = @transform_4, window_bounds = array<i64: 8, 72>}, {pipeline_mode = #tpu.pipeline_mode<synchronous>, transform_indices = @transform_5, window_bounds = array<i64: 8, 1>}, {pipeline_mode = #tpu.pipeline_mode<synchronous>, transform_indices = @transform_6, window_bounds = array<i64: 8, 72>}, {pipeline_mode = #tpu.pipeline_mode<synchronous>, transform_indices = @transform_7, window_bounds = array<i64: 8, 1>}, {pipeline_mode = #tpu.pipeline_mode<synchronous>, transform_indices = @transform_8, window_bounds = array<i64: 8, 1>}, {pipeline_mode = #tpu.pipeline_mode<synchronous>, transform_indices = @transform_9, window_bounds = array<i64: 1, 1>}, {transform_indices = @transform_10, window_bounds = array<i64: 1, 1, 512>}]} {
    %c0 = arith.constant 0 : index
    %c0_0 = arith.constant 0 : index
    %c0_1 = arith.constant 0 : index
    %0 = vector.load %arg1[%c0, %c0_0, %c0_1] : memref<1x64x512xf32, #tpu.memory_space<vmem>>, vector<1x64x512xf32>
    %1 = vector.shape_cast %0 : vector<1x64x512xf32> to vector<64x512xf32>
    %c0_2 = arith.constant 0 : index
    %c0_3 = arith.constant 0 : index
    %2 = vector.load %arg3[%c0_2, %c0_3] : memref<8x64xf32, #tpu.memory_space<vmem>>, vector<8x64xf32>
    %cst = arith.constant dense<0.000000e+00> : vector<8x512xf32>
    %3 = tpu.matmul %2, %1, %cst {dimension_numbers = #tpu.dot_dimension_numbers<[1], [0], [0], [1], [0, 0, 1, 1], [], []>} : vector<8x64xf32>, vector<64x512xf32>, vector<8x512xf32> -> vector<8x512xf32>
    %c0_4 = arith.constant 0 : index
    %c0_5 = arith.constant 0 : index
    %4 = vector.load %arg4[%c0_4, %c0_5] : memref<8x1xf32, #tpu.memory_space<vmem>>, vector<8x1xf32>
    %5 = vector.broadcast %4 : vector<8x1xf32> to vector<8x512xf32>
    %6 = arith.addf %3, %5 : vector<8x512xf32>
    %cst_6 = arith.constant 0.000000e+00 : f32
    %7 = vector.broadcast %cst_6 : f32 to vector<8x512xf32>
    %8 = arith.maximumf %6, %7 : vector<8x512xf32>
    %c68_i32 = arith.constant 68 : i32
    %9 = tpu.dynamic_rotate %8 by %c68_i32 dim 1 : vector<8x512xf32>, i32 -> vector<8x512xf32>
    %c0_7 = arith.constant 0 : index
    %c0_8 = arith.constant 0 : index
    %c0_9 = arith.constant 0 : index
    %10 = vector.load %arg2[%c0_7, %c0_8, %c0_9] : memref<9x8x512xf32, #tpu.memory_space<vmem>>, vector<1x8x512xf32>
    %11 = vector.shape_cast %10 : vector<1x8x512xf32> to vector<8x512xf32>
    %12 = arith.mulf %9, %11 : vector<8x512xf32>
    %c64_i32 = arith.constant 64 : i32
    %13 = tpu.dynamic_rotate %8 by %c64_i32 dim 1 : vector<8x512xf32>, i32 -> vector<8x512xf32>
    %c1 = arith.constant 1 : index
    %c0_10 = arith.constant 0 : index
    %c0_11 = arith.constant 0 : index
    %14 = vector.load %arg2[%c1, %c0_10, %c0_11] : memref<9x8x512xf32, #tpu.memory_space<vmem>>, vector<1x8x512xf32>
    %15 = vector.shape_cast %14 : vector<1x8x512xf32> to vector<8x512xf32>
    %16 = arith.mulf %13, %15 : vector<8x512xf32>
    %c60_i32 = arith.constant 60 : i32
    %17 = tpu.dynamic_rotate %8 by %c60_i32 dim 1 : vector<8x512xf32>, i32 -> vector<8x512xf32>
    %c2 = arith.constant 2 : index
    %c0_12 = arith.constant 0 : index
    %c0_13 = arith.constant 0 : index
    %18 = vector.load %arg2[%c2, %c0_12, %c0_13] : memref<9x8x512xf32, #tpu.memory_space<vmem>>, vector<1x8x512xf32>
    %19 = vector.shape_cast %18 : vector<1x8x512xf32> to vector<8x512xf32>
    %20 = arith.mulf %17, %19 : vector<8x512xf32>
    %c4_i32 = arith.constant 4 : i32
    %21 = tpu.dynamic_rotate %8 by %c4_i32 dim 1 : vector<8x512xf32>, i32 -> vector<8x512xf32>
    %c3 = arith.constant 3 : index
    %c0_14 = arith.constant 0 : index
    %c0_15 = arith.constant 0 : index
    %22 = vector.load %arg2[%c3, %c0_14, %c0_15] : memref<9x8x512xf32, #tpu.memory_space<vmem>>, vector<1x8x512xf32>
    %23 = vector.shape_cast %22 : vector<1x8x512xf32> to vector<8x512xf32>
    %24 = arith.mulf %21, %23 : vector<8x512xf32>
    %c508_i32 = arith.constant 508 : i32
    %25 = tpu.dynamic_rotate %8 by %c508_i32 dim 1 : vector<8x512xf32>, i32 -> vector<8x512xf32>
    %c5 = arith.constant 5 : index
    %c0_16 = arith.constant 0 : index
    %c0_17 = arith.constant 0 : index
    %26 = vector.load %arg2[%c5, %c0_16, %c0_17] : memref<9x8x512xf32, #tpu.memory_space<vmem>>, vector<1x8x512xf32>
    %27 = vector.shape_cast %26 : vector<1x8x512xf32> to vector<8x512xf32>
    %28 = arith.mulf %25, %27 : vector<8x512xf32>
    %c452_i32 = arith.constant 452 : i32
    %29 = tpu.dynamic_rotate %8 by %c452_i32 dim 1 : vector<8x512xf32>, i32 -> vector<8x512xf32>
    %c6 = arith.constant 6 : index
    %c0_18 = arith.constant 0 : index
    %c0_19 = arith.constant 0 : index
    %30 = vector.load %arg2[%c6, %c0_18, %c0_19] : memref<9x8x512xf32, #tpu.memory_space<vmem>>, vector<1x8x512xf32>
    %31 = vector.shape_cast %30 : vector<1x8x512xf32> to vector<8x512xf32>
    %32 = arith.mulf %29, %31 : vector<8x512xf32>
    %c448_i32 = arith.constant 448 : i32
    %33 = tpu.dynamic_rotate %8 by %c448_i32 dim 1 : vector<8x512xf32>, i32 -> vector<8x512xf32>
    %c7 = arith.constant 7 : index
    %c0_20 = arith.constant 0 : index
    %c0_21 = arith.constant 0 : index
    %34 = vector.load %arg2[%c7, %c0_20, %c0_21] : memref<9x8x512xf32, #tpu.memory_space<vmem>>, vector<1x8x512xf32>
    %35 = vector.shape_cast %34 : vector<1x8x512xf32> to vector<8x512xf32>
    %36 = arith.mulf %33, %35 : vector<8x512xf32>
    %c444_i32 = arith.constant 444 : i32
    %37 = tpu.dynamic_rotate %8 by %c444_i32 dim 1 : vector<8x512xf32>, i32 -> vector<8x512xf32>
    %c8 = arith.constant 8 : index
    %c0_22 = arith.constant 0 : index
    %c0_23 = arith.constant 0 : index
    %38 = vector.load %arg2[%c8, %c0_22, %c0_23] : memref<9x8x512xf32, #tpu.memory_space<vmem>>, vector<1x8x512xf32>
    %39 = vector.shape_cast %38 : vector<1x8x512xf32> to vector<8x512xf32>
    %40 = arith.mulf %37, %39 : vector<8x512xf32>
    %41 = tpu.concatenate %12, %16, %20, %24, %8, %28, %32, %36, %40 in 0 : vector<8x512xf32>, vector<8x512xf32>, vector<8x512xf32>, vector<8x512xf32>, vector<8x512xf32>, vector<8x512xf32>, vector<8x512xf32>, vector<8x512xf32>, vector<8x512xf32> -> vector<72x512xf32>
    %c0_24 = arith.constant 0 : index
    %c0_25 = arith.constant 0 : index
    %42 = vector.load %arg5[%c0_24, %c0_25] : memref<8x72xf32, #tpu.memory_space<vmem>>, vector<8x72xf32>
    %cst_26 = arith.constant dense<0.000000e+00> : vector<8x512xf32>
    %43 = tpu.matmul %42, %41, %cst_26 {dimension_numbers = #tpu.dot_dimension_numbers<[1], [0], [0], [1], [0, 0, 1, 1], [], []>} : vector<8x72xf32>, vector<72x512xf32>, vector<8x512xf32> -> vector<8x512xf32>
    %c0_27 = arith.constant 0 : index
    %c0_28 = arith.constant 0 : index
    %44 = vector.load %arg6[%c0_27, %c0_28] : memref<8x1xf32, #tpu.memory_space<vmem>>, vector<8x1xf32>
    %45 = vector.broadcast %44 : vector<8x1xf32> to vector<8x512xf32>
    %46 = arith.addf %43, %45 : vector<8x512xf32>
    %cst_29 = arith.constant 0.000000e+00 : f32
    %47 = vector.broadcast %cst_29 : f32 to vector<8x512xf32>
    %48 = arith.maximumf %46, %47 : vector<8x512xf32>
    %c68_i32_30 = arith.constant 68 : i32
    %49 = tpu.dynamic_rotate %48 by %c68_i32_30 dim 1 : vector<8x512xf32>, i32 -> vector<8x512xf32>
    %c0_31 = arith.constant 0 : index
    %c0_32 = arith.constant 0 : index
    %c0_33 = arith.constant 0 : index
    %50 = vector.load %arg2[%c0_31, %c0_32, %c0_33] : memref<9x8x512xf32, #tpu.memory_space<vmem>>, vector<1x8x512xf32>
    %51 = vector.shape_cast %50 : vector<1x8x512xf32> to vector<8x512xf32>
    %52 = arith.mulf %49, %51 : vector<8x512xf32>
    %c64_i32_34 = arith.constant 64 : i32
    %53 = tpu.dynamic_rotate %48 by %c64_i32_34 dim 1 : vector<8x512xf32>, i32 -> vector<8x512xf32>
    %c1_35 = arith.constant 1 : index
    %c0_36 = arith.constant 0 : index
    %c0_37 = arith.constant 0 : index
    %54 = vector.load %arg2[%c1_35, %c0_36, %c0_37] : memref<9x8x512xf32, #tpu.memory_space<vmem>>, vector<1x8x512xf32>
    %55 = vector.shape_cast %54 : vector<1x8x512xf32> to vector<8x512xf32>
    %56 = arith.mulf %53, %55 : vector<8x512xf32>
    %c60_i32_38 = arith.constant 60 : i32
    %57 = tpu.dynamic_rotate %48 by %c60_i32_38 dim 1 : vector<8x512xf32>, i32 -> vector<8x512xf32>
    %c2_39 = arith.constant 2 : index
    %c0_40 = arith.constant 0 : index
    %c0_41 = arith.constant 0 : index
    %58 = vector.load %arg2[%c2_39, %c0_40, %c0_41] : memref<9x8x512xf32, #tpu.memory_space<vmem>>, vector<1x8x512xf32>
    %59 = vector.shape_cast %58 : vector<1x8x512xf32> to vector<8x512xf32>
    %60 = arith.mulf %57, %59 : vector<8x512xf32>
    %c4_i32_42 = arith.constant 4 : i32
    %61 = tpu.dynamic_rotate %48 by %c4_i32_42 dim 1 : vector<8x512xf32>, i32 -> vector<8x512xf32>
    %c3_43 = arith.constant 3 : index
    %c0_44 = arith.constant 0 : index
    %c0_45 = arith.constant 0 : index
    %62 = vector.load %arg2[%c3_43, %c0_44, %c0_45] : memref<9x8x512xf32, #tpu.memory_space<vmem>>, vector<1x8x512xf32>
    %63 = vector.shape_cast %62 : vector<1x8x512xf32> to vector<8x512xf32>
    %64 = arith.mulf %61, %63 : vector<8x512xf32>
    %c508_i32_46 = arith.constant 508 : i32
    %65 = tpu.dynamic_rotate %48 by %c508_i32_46 dim 1 : vector<8x512xf32>, i32 -> vector<8x512xf32>
    %c5_47 = arith.constant 5 : index
    %c0_48 = arith.constant 0 : index
    %c0_49 = arith.constant 0 : index
    %66 = vector.load %arg2[%c5_47, %c0_48, %c0_49] : memref<9x8x512xf32, #tpu.memory_space<vmem>>, vector<1x8x512xf32>
    %67 = vector.shape_cast %66 : vector<1x8x512xf32> to vector<8x512xf32>
    %68 = arith.mulf %65, %67 : vector<8x512xf32>
    %c452_i32_50 = arith.constant 452 : i32
    %69 = tpu.dynamic_rotate %48 by %c452_i32_50 dim 1 : vector<8x512xf32>, i32 -> vector<8x512xf32>
    %c6_51 = arith.constant 6 : index
    %c0_52 = arith.constant 0 : index
    %c0_53 = arith.constant 0 : index
    %70 = vector.load %arg2[%c6_51, %c0_52, %c0_53] : memref<9x8x512xf32, #tpu.memory_space<vmem>>, vector<1x8x512xf32>
    %71 = vector.shape_cast %70 : vector<1x8x512xf32> to vector<8x512xf32>
    %72 = arith.mulf %69, %71 : vector<8x512xf32>
    %c448_i32_54 = arith.constant 448 : i32
    %73 = tpu.dynamic_rotate %48 by %c448_i32_54 dim 1 : vector<8x512xf32>, i32 -> vector<8x512xf32>
    %c7_55 = arith.constant 7 : index
    %c0_56 = arith.constant 0 : index
    %c0_57 = arith.constant 0 : index
    %74 = vector.load %arg2[%c7_55, %c0_56, %c0_57] : memref<9x8x512xf32, #tpu.memory_space<vmem>>, vector<1x8x512xf32>
    %75 = vector.shape_cast %74 : vector<1x8x512xf32> to vector<8x512xf32>
    %76 = arith.mulf %73, %75 : vector<8x512xf32>
    %c444_i32_58 = arith.constant 444 : i32
    %77 = tpu.dynamic_rotate %48 by %c444_i32_58 dim 1 : vector<8x512xf32>, i32 -> vector<8x512xf32>
    %c8_59 = arith.constant 8 : index
    %c0_60 = arith.constant 0 : index
    %c0_61 = arith.constant 0 : index
    %78 = vector.load %arg2[%c8_59, %c0_60, %c0_61] : memref<9x8x512xf32, #tpu.memory_space<vmem>>, vector<1x8x512xf32>
    %79 = vector.shape_cast %78 : vector<1x8x512xf32> to vector<8x512xf32>
    %80 = arith.mulf %77, %79 : vector<8x512xf32>
    %81 = tpu.concatenate %52, %56, %60, %64, %48, %68, %72, %76, %80 in 0 : vector<8x512xf32>, vector<8x512xf32>, vector<8x512xf32>, vector<8x512xf32>, vector<8x512xf32>, vector<8x512xf32>, vector<8x512xf32>, vector<8x512xf32>, vector<8x512xf32> -> vector<72x512xf32>
    %c0_62 = arith.constant 0 : index
    %c0_63 = arith.constant 0 : index
    %82 = vector.load %arg7[%c0_62, %c0_63] : memref<8x72xf32, #tpu.memory_space<vmem>>, vector<8x72xf32>
    %cst_64 = arith.constant dense<0.000000e+00> : vector<8x512xf32>
    %83 = tpu.matmul %82, %81, %cst_64 {dimension_numbers = #tpu.dot_dimension_numbers<[1], [0], [0], [1], [0, 0, 1, 1], [], []>} : vector<8x72xf32>, vector<72x512xf32>, vector<8x512xf32> -> vector<8x512xf32>
    %c0_65 = arith.constant 0 : index
    %c0_66 = arith.constant 0 : index
    %84 = vector.load %arg8[%c0_65, %c0_66] : memref<8x1xf32, #tpu.memory_space<vmem>>, vector<8x1xf32>
    %85 = vector.broadcast %84 : vector<8x1xf32> to vector<8x512xf32>
    %86 = arith.addf %83, %85 : vector<8x512xf32>
    %cst_67 = arith.constant 0.000000e+00 : f32
    %87 = vector.broadcast %cst_67 : f32 to vector<8x512xf32>
    %88 = arith.maximumf %86, %87 : vector<8x512xf32>
    %c0_68 = arith.constant 0 : index
    %c0_69 = arith.constant 0 : index
    %89 = vector.load %arg9[%c0_68, %c0_69] : memref<8x1xf32, #tpu.memory_space<vmem>>, vector<8x1xf32>
    %90 = vector.broadcast %89 : vector<8x1xf32> to vector<8x512xf32>
    %91 = arith.mulf %90, %88 : vector<8x512xf32>
    %cst_70 = arith.constant dense<0.000000e+00> : vector<512xf32>
    %92 = vector.multi_reduction <add>, %91, %cst_70 [0] : vector<8x512xf32> to vector<512xf32>
    %93 = vector.shape_cast %92 : vector<512xf32> to vector<1x512xf32>
    %c0_71 = arith.constant 0 : index
    %c0_72 = arith.constant 0 : index
    %94 = vector.load %arg10[%c0_71, %c0_72] : memref<1x1xf32, #tpu.memory_space<vmem>>, vector<1x1xf32>
    %95 = vector.broadcast %94 : vector<1x1xf32> to vector<1x512xf32>
    %96 = arith.addf %93, %95 : vector<1x512xf32>
    %97 = vector.shape_cast %96 : vector<1x512xf32> to vector<1x1x512xf32>
    %c0_73 = arith.constant 0 : index
    %c0_74 = arith.constant 0 : index
    %c0_75 = arith.constant 0 : index
    %98 = vector.load %arg11[%c0_73, %c0_74, %c0_75] : memref<1x1x512xf32, #tpu.memory_space<vmem>>, vector<1x1x512xf32>
    tpu.vector_store %arg11[%c0_73, %c0_74, %c0_75], %97 {strides = array<i32>} : memref<1x1x512xf32, #tpu.memory_space<vmem>>, vector<1x1x512xf32>,
    return
  }
  func.func @transform_0(%arg0: i32) -> (i32, i32, i32) {
    %c0_i32 = arith.constant 0 : i32
    %c0_i32_0 = arith.constant 0 : i32
    %c0_i32_1 = arith.constant 0 : i32
    return %arg0, %c0_i32, %c0_i32_0 : i32, i32, i32
  }
  func.func @transform_1(%arg0: i32) -> (i32, i32, i32) {
    %c0_i32 = arith.constant 0 : i32
    %c0_i32_0 = arith.constant 0 : i32
    %c0_i32_1 = arith.constant 0 : i32
    %c0_i32_2 = arith.constant 0 : i32
    return %c0_i32, %c0_i32_0, %c0_i32_1 : i32, i32, i32
  }
  func.func @transform_2(%arg0: i32) -> (i32, i32) {
    %c0_i32 = arith.constant 0 : i32
    %c0_i32_0 = arith.constant 0 : i32
    %c0_i32_1 = arith.constant 0 : i32
    return %c0_i32, %c0_i32_0 : i32, i32
  }
  func.func @transform_3(%arg0: i32) -> (i32, i32) {
    %c0_i32 = arith.constant 0 : i32
    %c0_i32_0 = arith.constant 0 : i32
    %c0_i32_1 = arith.constant 0 : i32
    return %c0_i32, %c0_i32_0 : i32, i32
  }
  func.func @transform_4(%arg0: i32) -> (i32, i32) {
    %c0_i32 = arith.constant 0 : i32
    %c0_i32_0 = arith.constant 0 : i32
    %c0_i32_1 = arith.constant 0 : i32
    return %c0_i32, %c0_i32_0 : i32, i32
  }
  func.func @transform_5(%arg0: i32) -> (i32, i32) {
    %c0_i32 = arith.constant 0 : i32
    %c0_i32_0 = arith.constant 0 : i32
    %c0_i32_1 = arith.constant 0 : i32
    return %c0_i32, %c0_i32_0 : i32, i32
  }
  func.func @transform_6(%arg0: i32) -> (i32, i32) {
    %c0_i32 = arith.constant 0 : i32
    %c0_i32_0 = arith.constant 0 : i32
    %c0_i32_1 = arith.constant 0 : i32
    return %c0_i32, %c0_i32_0 : i32, i32
  }
  func.func @transform_7(%arg0: i32) -> (i32, i32) {
    %c0_i32 = arith.constant 0 : i32
    %c0_i32_0 = arith.constant 0 : i32
    %c0_i32_1 = arith.constant 0 : i32
    return %c0_i32, %c0_i32_0 : i32, i32
  }
  func.func @transform_8(%arg0: i32) -> (i32, i32) {
    %c0_i32 = arith.constant 0 : i32
    %c0_i32_0 = arith.constant 0 : i32
    %c0_i32_1 = arith.constant 0 : i32
    return %c0_i32, %c0_i32_0 : i32, i32
  }
  func.func @transform_9(%arg0: i32) -> (i32, i32) {
    %c0_i32 = arith.constant 0 : i32
    %c0_i32_0 = arith.constant 0 : i32
    %c0_i32_1 = arith.constant 0 : i32
    return %c0_i32, %c0_i32_0 : i32, i32
  }
  func.func @transform_10(%arg0: i32) -> (i32, i32, i32) {
    %c0_i32 = arith.constant 0 : i32
    %c0_i32_0 = arith.constant 0 : i32
    %c0_i32_1 = arith.constant 0 : i32
    return %arg0, %c0_i32, %c0_i32_0 : i32, i32, i32
  }
}

</mosaic_0001>

<llo_original>
// kernel: spatial_gate_pallas.1
$region0: #{spatial_gate_pallas.1}
  #allocation0 [shape = 'u32[]', space=smem, size = 0x4, offset = 0x4, fixed_abs, tag = 'smem constant byte address 0x4 - core index']
  #allocation1 [shape = 'u32[144,128]{1,0:T(1,128)}', space=vmem, size = 0x12000, scoped, tag = 'internal scratch']
  #allocation2 [shape = 'f32[1,1]{1,0:T(1,128)S(1)}', space=vmem, size = 0x200, scoped, tag = 'scoped memory for spatial_gate_pallas.1']
  %s0 = inlined_call_operand.vmem [shape: f32[2,64,512], index: 0, kind: input, shape index: {}]
  %s1 = inlined_call_operand.vmem [shape: f32[9,8,512], index: 1, kind: input, shape index: {}]
  %s2 = inlined_call_operand.vmem [shape: f32[8,64], index: 2, kind: input, shape index: {}]
  %s3 = inlined_call_operand.vmem [shape: f32[8,1], index: 3, kind: input, shape index: {}]
  %s4 = inlined_call_operand.vmem [shape: f32[8,72], index: 4, kind: input, shape index: {}]
  %s5 = inlined_call_operand.vmem [shape: f32[8,1], index: 5, kind: input, shape index: {}]
  %s6 = inlined_call_operand.vmem [shape: f32[8,72], index: 6, kind: input, shape index: {}]
  %s7 = inlined_call_operand.vmem [shape: f32[8,1], index: 7, kind: input, shape index: {}]
  %s8 = inlined_call_operand.vmem [shape: f32[8,1], index: 8, kind: input, shape index: {}]
  %s9 = inlined_call_operand.<no memory space> [shape: f32[1,1], index: 9, kind: input, shape index: {}]
  %s10 = inlined_call_operand.vmem [shape: f32[2,1,512], index: 10, kind: output, shape index: {}]
  %s11 = sld [smem:[#allocation0]]
  $region73: #{spatial_gate_pallas.1} parent=0
    _
  %s13 = ssub.s32 1, %s11
  %s14 = scalar_select 0, %s13, %s11
  %v15 = vstv %s9
  %16 = vst [vmem:[#allocation2] sm:$0x1] %v15
  loop: start=0, step=1, limit=4
  $region2: #{spatial_gate_pallas.1} parent=0 // loop_pre_header
    _
  $region3: #{spatial_gate_pallas.1} parent=0 // loop_header
    %s18 = sphi 0, %s22
    %p19 = scmp.ge.s32.totalorder %s18, 4
    %s28 = sphi 0, %s30
    %s31 = sphi 0, %s28
    %s32 = sphi 0, %s31
    %s48 = sphi 0, %s32
    %s52 = sphi 0, %s52
    %s54 = sphi 0, %s52
    %s55 = sphi 0, %s54
    %s69 = sphi 0, %s55
    %s73 = sphi 0, %s73
    %s75 = sphi 0, %s73
    %s76 = sphi 0, %s75
    %s90 = sphi 0, %s76
    %s94 = sphi 0, %s94
    %s96 = sphi 0, %s94
    %s97 = sphi 0, %s96
    %s111 = sphi 0, %s97
    %s115 = sphi 0, %s115
    %s117 = sphi 0, %s115
    %s118 = sphi 0, %s117
    %s132 = sphi 0, %s118
    %s136 = sphi 0, %s136
    %s138 = sphi 0, %s136
    %s139 = sphi 0, %s138
    %s153 = sphi 0, %s139
    %s157 = sphi 0, %s157
    %s159 = sphi 0, %s157
    %s160 = sphi 0, %s159
    %s174 = sphi 0, %s160
    %s178 = sphi 0, %s178
    %s180 = sphi 0, %s178
    %s181 = sphi 0, %s180
    %s195 = sphi 0, %s181
    %s199 = sphi 0, %s199
    %s201 = sphi 0, %s199
    %s202 = sphi 0, %s201
    %s216 = sphi 0, %s202
    %s220 = sphi 0, %s220
    %s222 = sphi 0, %s220
    %s223 = sphi 0, %s222
    %s237 = sphi 0, %s223
    %s243 = sphi 0, %s245
    %s246 = sphi 0, %s243
    %s247 = sphi 0, %s246
    %s263 = sphi 0, %s247
  $region4: #{spatial_gate_pallas.1} parent=0 // loop_header_branch
    %21 = sbr.rel (%p19) target = $region8
  $region5: #{spatial_gate_pallas.1} parent=0 // loop_body
    %s23 = ssub.s32 %s18, 1
    %s24 = ssub.s32 %s18, 2
    %s25 = sadd.s32 %s18, 1
    %s26 = ssub.s32 %s18, %s25
    %p27 = scmp.eq.s32.totalorder %s26, 0
    %s29 = sadd.s32 %s28, 1
    %s30 = scalar_select %p27, %s28, %s29
    %p33 = pneg %p27
    %p34 = scmp.eq.s32.totalorder %s18, 1
    %p35 = por %p33, %p34
    %p36 = scmp.ne.s32.totalorder %s28, %s31
    %p37 = scmp.eq.s32.totalorder %s18, 0
    %p38 = por %p36, %p37
    %p39 = scmp.ne.s32.totalorder %s28, %s31
    %p40 = scmp.eq.s32.totalorder %s23, 1
    %p41 = por %p39, %p40
    %p42 = scmp.ne.s32.totalorder %s31, %s32
    %p43 = scmp.eq.s32.totalorder %s23, 0
    %p44 = por %p42, %p43
    %p45 = scmp.ne.s32.totalorder %s31, %s32
    %p46 = scmp.eq.s32.totalorder %s24, 1
    %p47 = por %p45, %p46
    %p49 = scmp.ne.s32.totalorder %s32, %s48
    %p50 = scmp.eq.s32.totalorder %s24, 0
    %p51 = por %p49, %p50
    %s53 = sadd.s32 %s52, 1
    %p56 = scmp.eq.s32.totalorder %s18, 1
    %p57 = scmp.ne.s32.totalorder %s52, %s54
    %p58 = scmp.eq.s32.totalorder %s18, 0
    %p59 = por %p57, %p58
    %p60 = scmp.ne.s32.totalorder %s52, %s54
    %p61 = scmp.eq.s32.totalorder %s23, 1
    %p62 = por %p60, %p61
    %p63 = scmp.ne.s32.totalorder %s54, %s55
    %p64 = scmp.eq.s32.totalorder %s23, 0
    %p65 = por %p63, %p64
    %p66 = scmp.ne.s32.totalorder %s54, %s55
    %p67 = scmp.eq.s32.totalorder %s24, 1
    %p68 = por %p66, %p67
    %p70 = scmp.ne.s32.totalorder %s55, %s69
    %p71 = scmp.eq.s32.totalorder %s24, 0
    %p72 = por %p70, %p71
    %s74 = sadd.s32 %s73, 1
    %p77 = scmp.eq.s32.totalorder %s18, 1
    %p78 = scmp.ne.s32.totalorder %s73, %s75
    %p79 = scmp.eq.s32.totalorder %s18, 0
    %p80 = por %p78, %p79
    %p81 = scmp.ne.s32.totalorder %s73, %s75
    %p82 = scmp.eq.s32.totalorder %s23, 1
    %p83 = por %p81, %p82
    %p84 = scmp.ne.s32.totalorder %s75, %s76
    %p85 = scmp.eq.s32.totalorder %s23, 0
    %p86 = por %p84, %p85
    %p87 = scmp.ne.s32.totalorder %s75, %s76
    %p88 = scmp.eq.s32.totalorder %s24, 1
    %p89 = por %p87, %p88
    %p91 = scmp.ne.s32.totalorder %s76, %s90
    %p92 = scmp.eq.s32.totalorder %s24, 0
    %p93 = por %p91, %p92
    %s95 = sadd.s32 %s94, 1
    %p98 = scmp.eq.s32.totalorder %s18, 1
    %p99 = scmp.ne.s32.totalorder %s94, %s96
    %p100 = scmp.eq.s32.totalorder %s18, 0
    %p101 = por %p99, %p100
    %p102 = scmp.ne.s32.totalorder %s94, %s96
    %p103 = scmp.eq.s32.totalorder %s23, 1
    %p104 = por %p102, %p103
    %p105 = scmp.ne.s32.totalorder %s96, %s97
    %p106 = scmp.eq.s32.totalorder %s23, 0
    %p107 = por %p105, %p106
    %p108 = scmp.ne.s32.totalorder %s96, %s97
    %p109 = scmp.eq.s32.totalorder %s24, 1
    %p110 = por %p108, %p109
    %p112 = scmp.ne.s32.totalorder %s97, %s111
    %p113 = scmp.eq.s32.totalorder %s24, 0
    %p114 = por %p112, %p113
    %s116 = sadd.s32 %s115, 1
    %p119 = scmp.eq.s32.totalorder %s18, 1
    %p120 = scmp.ne.s32.totalorder %s115, %s117
    %p121 = scmp.eq.s32.totalorder %s18, 0
    %p122 = por %p120, %p121
    %p123 = scmp.ne.s32.totalorder %s115, %s117
    %p124 = scmp.eq.s32.totalorder %s23, 1
    %p125 = por %p123, %p124
    %p126 = scmp.ne.s32.totalorder %s117, %s118
    %p127 = scmp.eq.s32.totalorder %s23, 0
    %p128 = por %p126, %p127
    %p129 = scmp.ne.s32.totalorder %s117, %s118
    %p130 = scmp.eq.s32.totalorder %s24, 1
    %p131 = por %p129, %p130
    %p133 = scmp.ne.s32.totalorder %s118, %s132
    %p134 = scmp.eq.s32.totalorder %s24, 0
    %p135 = por %p133, %p134
    %s137 = sadd.s32 %s136, 1
    %p140 = scmp.eq.s32.totalorder %s18, 1
    %p141 = scmp.ne.s32.totalorder %s136, %s138
    %p142 = scmp.eq.s32.totalorder %s18, 0
    %p143 = por %p141, %p142
    %p144 = scmp.ne.s32.totalorder %s136, %s138
    %p145 = scmp.eq.s32.totalorder %s23, 1
    %p146 = por %p144, %p145
    %p147 = scmp.ne.s32.totalorder %s138, %s139
    %p148 = scmp.eq.s32.totalorder %s23, 0
    %p149 = por %p147, %p148
    %p150 = scmp.ne.s32.totalorder %s138, %s139
    %p151 = scmp.eq.s32.totalorder %s24, 1
    %p152 = por %p150, %p151
    %p154 = scmp.ne.s32.totalorder %s139, %s153
    %p155 = scmp.eq.s32.totalorder %s24, 0
    %p156 = por %p154, %p155
    %s158 = sadd.s32 %s157, 1
    %p161 = scmp.eq.s32.totalorder %s18, 1
    %p162 = scmp.ne.s32.totalorder %s157, %s159
    %p163 = scmp.eq.s32.totalorder %s18, 0
    %p164 = por %p162, %p163
    %p165 = scmp.ne.s32.totalorder %s157, %s159
    %p166 = scmp.eq.s32.totalorder %s23, 1
    %p167 = por %p165, %p166
    %p168 = scmp.ne.s32.totalorder %s159, %s160
    %p169 = scmp.eq.s32.totalorder %s23, 0
    %p170 = por %p168, %p169
    %p171 = scmp.ne.s32.totalorder %s159, %s160
    %p172 = scmp.eq.s32.totalorder %s24, 1
    %p173 = por %p171, %p172
    %p175 = scmp.ne.s32.totalorder %s160, %s174
    %p176 = scmp.eq.s32.totalorder %s24, 0
    %p177 = por %p175, %p176
    %s179 = sadd.s32 %s178, 1
    %p182 = scmp.eq.s32.totalorder %s18, 1
    %p183 = scmp.ne.s32.totalorder %s178, %s180
    %p184 = scmp.eq.s32.totalorder %s18, 0
    %p185 = por %p183, %p184
    %p186 = scmp.ne.s32.totalorder %s178, %s180
    %p187 = scmp.eq.s32.totalorder %s23, 1
    %p188 = por %p186, %p187
    %p189 = scmp.ne.s32.totalorder %s180, %s181
    %p190 = scmp.eq.s32.totalorder %s23, 0
    %p191 = por %p189, %p190
    %p192 = scmp.ne.s32.totalorder %s180, %s181
    %p193 = scmp.eq.s32.totalorder %s24, 1
    %p194 = por %p192, %p193
    %p196 = scmp.ne.s32.totalorder %s181, %s195
    %p197 = scmp.eq.s32.totalorder %s24, 0
    %p198 = por %p196, %p197
    %s200 = sadd.s32 %s199, 1
    %p203 = scmp.eq.s32.totalorder %s18, 1
    %p204 = scmp.ne.s32.totalorder %s199, %s201
    %p205 = scmp.eq.s32.totalorder %s18, 0
    %p206 = por %p204, %p205
    %p207 = scmp.ne.s32.totalorder %s199, %s201
    %p208 = scmp.eq.s32.totalorder %s23, 1
    %p209 = por %p207, %p208
    %p210 = scmp.ne.s32.totalorder %s201, %s202
    %p211 = scmp.eq.s32.totalorder %s23, 0
    %p212 = por %p210, %p211
    %p213 = scmp.ne.s32.totalorder %s201, %s202
    %p214 = scmp.eq.s32.totalorder %s24, 1
    %p215 = por %p213, %p214
    %p217 = scmp.ne.s32.totalorder %s202, %s216
    %p218 = scmp.eq.s32.totalorder %s24, 0
    %p219 = por %p217, %p218
    %s221 = sadd.s32 %s220, 1
    %p224 = scmp.eq.s32.totalorder %s18, 1
    %p225 = scmp.ne.s32.totalorder %s220, %s222
    %p226 = scmp.eq.s32.totalorder %s18, 0
    %p227 = por %p225, %p226
    %p228 = scmp.ne.s32.totalorder %s220, %s222
    %p229 = scmp.eq.s32.totalorder %s23, 1
    %p230 = por %p228, %p229
    %p231 = scmp.ne.s32.totalorder %s222, %s223
    %p232 = scmp.eq.s32.totalorder %s23, 0
    %p233 = por %p231, %p232
    %p234 = scmp.ne.s32.totalorder %s222, %s223
    %p235 = scmp.eq.s32.totalorder %s24, 1
    %p236 = por %p234, %p235
    %p238 = scmp.ne.s32.totalorder %s223, %s237
    %p239 = scmp.eq.s32.totalorder %s24, 0
    %p240 = por %p238, %p239
    %s241 = ssub.s32 %s18, %s25
    %p242 = scmp.eq.s32.totalorder %s241, 0
    %s244 = sadd.s32 %s243, 1
    %s245 = scalar_select %p242, %s243, %s244
    %p248 = pneg %p242
    %p249 = scmp.eq.s32.totalorder %s18, 1
    %p250 = por %p248, %p249
    %p251 = scmp.ne.s32.totalorder %s243, %s246
    %p252 = scmp.eq.s32.totalorder %s18, 0
    %p253 = por %p251, %p252
    %p254 = scmp.ne.s32.totalorder %s243, %s246
    %p255 = scmp.eq.s32.totalorder %s23, 1
    %p256 = por %p254, %p255
    %p257 = scmp.ne.s32.totalorder %s246, %s247
    %p258 = scmp.eq.s32.totalorder %s23, 0
    %p259 = por %p257, %p258
    %p260 = scmp.ne.s32.totalorder %s246, %s247
    %p261 = scmp.eq.s32.totalorder %s24, 1
    %p262 = por %p260, %p261
    %p264 = scmp.ne.s32.totalorder %s247, %s263
    %p265 = scmp.eq.s32.totalorder %s24, 0
    %p266 = por %p264, %p265
    %p267 = scmp.le.s32.totalorder 1, %s18
    %p268 = scmp.lt.s32.totalorder %s18, 3
    %p269 = pnand %p267, %p268
    %p270 = pneg %p269
    // Predicated region
    $region9: #{spatial_gate_pallas.1} parent=5 // pred_check
      _
    $region10: #{spatial_gate_pallas.1} parent=5 // pred_check_branch
      %272 = sbr.rel (%p269) target = $region12
    $region11: #{spatial_gate_pallas.1} parent=5 // pred_region
      %s273 = ssub.s32 %s18, 1
      // Predicated region
      $region13: #{spatial_gate_pallas.1} parent=11 // pred_check
        %p274 = pneg %p65
      $region14: #{spatial_gate_pallas.1} parent=11 // pred_check_branch
        %276 = sbr.rel (%p274) target = $region16
      $region15: #{spatial_gate_pallas.1} parent=11 // pred_region
        _
      $region16: #{spatial_gate_pallas.1} parent=11 // pred_fallthru
        _
      // Predicated region
      $region17: #{spatial_gate_pallas.1} parent=11 // pred_check
        %p277 = pneg %p86
      $region18: #{spatial_gate_pallas.1} parent=11 // pred_check_branch
        %279 = sbr.rel (%p277) target = $region20
      $region19: #{spatial_gate_pallas.1} parent=11 // pred_region
        _
      $region20: #{spatial_gate_pallas.1} parent=11 // pred_fallthru
        _
      // Predicated region
      $region21: #{spatial_gate_pallas.1} parent=11 // pred_check
        %p280 = pneg %p107
      $region22: #{spatial_gate_pallas.1} parent=11 // pred_check_branch
        %282 = sbr.rel (%p280) target = $region24
      $region23: #{spatial_gate_pallas.1} parent=11 // pred_region
        _
      $region24: #{spatial_gate_pallas.1} parent=11 // pred_fallthru
        _
      // Predicated region
      $region25: #{spatial_gate_pallas.1} parent=11 // pred_check
        %p283 = pneg %p128
      $region26: #{spatial_gate_pallas.1} parent=11 // pred_check_branch
        %285 = sbr.rel (%p283) target = $region28
      $region27: #{spatial_gate_pallas.1} parent=11 // pred_region
        _
      $region28: #{spatial_gate_pallas.1} parent=11 // pred_fallthru
        _
      // Predicated region
      $region29: #{spatial_gate_pallas.1} parent=11 // pred_check
        %p286 = pneg %p149
      $region30: #{spatial_gate_pallas.1} parent=11 // pred_check_branch
        %288 = sbr.rel (%p286) target = $region32
      $region31: #{spatial_gate_pallas.1} parent=11 // pred_region
        _
      $region32: #{spatial_gate_pallas.1} parent=11 // pred_fallthru
        _
      // Predicated region
      $region33: #{spatial_gate_pallas.1} parent=11 // pred_check
        %p289 = pneg %p170
      $region34: #{spatial_gate_pallas.1} parent=11 // pred_check_branch
        %291 = sbr.rel (%p289) target = $region36
      $region35: #{spatial_gate_pallas.1} parent=11 // pred_region
        _
      $region36: #{spatial_gate_pallas.1} parent=11 // pred_fallthru
        _
      // Predicated region
      $region37: #{spatial_gate_pallas.1} parent=11 // pred_check
        %p292 = pneg %p191
      $region38: #{spatial_gate_pallas.1} parent=11 // pred_check_branch
        %294 = sbr.rel (%p292) target = $region40
      $region39: #{spatial_gate_pallas.1} parent=11 // pred_region
        _
      $region40: #{spatial_gate_pallas.1} parent=11 // pred_fallthru
        _
      // Predicated region
      $region41: #{spatial_gate_pallas.1} parent=11 // pred_check
        %p295 = pneg %p212
      $region42: #{spatial_gate_pallas.1} parent=11 // pred_check_branch
        %297 = sbr.rel (%p295) target = $region44
      $region43: #{spatial_gate_pallas.1} parent=11 // pred_region
        _
      $region44: #{spatial_gate_pallas.1} parent=11 // pred_fallthru
        _
      // Predicated region
      $region45: #{spatial_gate_pallas.1} parent=11 // pred_check
        %p298 = pneg %p233
      $region46: #{spatial_gate_pallas.1} parent=11 // pred_check_branch
        %300 = sbr.rel (%p298) target = $region48
      $region47: #{spatial_gate_pallas.1} parent=11 // pred_region
        _
      $region48: #{spatial_gate_pallas.1} parent=11 // pred_fallthru
        _
    $region12: #{spatial_gate_pallas.1} parent=5 // pred_fallthru
      _
    %p301 = scmp.lt.s32.totalorder %s18, 2
    // Predicated region
    $region49: #{spatial_gate_pallas.1} parent=5 // pred_check
      %p302 = pneg %p301
    $region50: #{spatial_gate_pallas.1} parent=5 // pred_check_branch
      %304 = sbr.rel (%p302) target = $region52
    $region51: #{spatial_gate_pallas.1} parent=5 // pred_region
      // Predicated region
      $region53: #{spatial_gate_pallas.1} parent=51 // pred_check
        %p305 = pneg %p38
      $region54: #{spatial_gate_pallas.1} parent=51 // pred_check_branch
        %307 = sbr.rel (%p305) target = $region56
      $region55: #{spatial_gate_pallas.1} parent=51 // pred_region
        %p308 = scmp.lt.s32.totalorder %s18, 1
        %s309 = scalar_select %p308, %s18, 1
        %s310 = smul.addr %s309, 32
        %s311 = smul.addr %s310, 8
        %s312 = scalar_lea.vmem %s0, %s311
      $region56: #{spatial_gate_pallas.1} parent=51 // pred_fallthru
        _
    $region52: #{spatial_gate_pallas.1} parent=5 // pred_fallthru
      _
    %p313 = scmp.le.s32.totalorder 1, %s18
    %p314 = scmp.lt.s32.totalorder %s18, 3
    %p315 = pnand %p313, %p314
    %p316 = pneg %p315
    // Predicated region
    $region57: #{spatial_gate_pallas.1} parent=5 // pred_check
      _
    $region58: #{spatial_gate_pallas.1} parent=5 // pred_check_branch
      %318 = sbr.rel (%p315) target = $region60
    $region59: #{spatial_gate_pallas.1} parent=5 // pred_region
      %s319 = ssub.s32 %s18, 1
      %p320 = scmp.lt.s32.totalorder %s23, 1
      %s321 = scalar_select %p320, %s23, 1
      %s322 = smul.addr %s321, 32
      %s323 = smul.addr %s322, 8
      %s324 = scalar_lea.vmem %s0, %s323
      %p325 = pneg %p44
      %p326 = pneg %p41
      %p327 = pneg %p65
      %p328 = pneg %p62
      %p329 = pneg %p86
      %p330 = pneg %p83
      %p331 = pneg %p107
      %p332 = pneg %p104
      %p333 = pneg %p128
      %p334 = pneg %p125
      %p335 = pneg %p149
      %p336 = pneg %p146
      %p337 = pneg %p170
      %p338 = pneg %p167
      %p339 = pneg %p191
      %p340 = pneg %p188
      %p341 = pneg %p212
      %p342 = pneg %p209
      %p343 = pneg %p233
      %p344 = pneg %p230
      %p345 = pneg %p259
      %p346 = pneg %p256
      %p347 = scmp.lt.s32.totalorder %s23, 1
      %s348 = scalar_select %p347, %s23, 1
      %s349 = smul.addr %s348, 4
      %s350 = scalar_lea.vmem %s10, %s349
      %p351 = scmp.lt.s32.totalorder %s23, 1
      %s352 = scalar_select %p351, %s23, 1
      %s353 = smul.addr %s352, 32
      %s354 = smul.addr %s353, 8
      %s355 = scalar_lea.vmem %s0, %s354
      %p356 = scmp.lt.s32.totalorder %s23, 1
      %s357 = scalar_select %p356, %s23, 1
      %s358 = smul.addr %s357, 4
      %s359 = scalar_lea.vmem %s10, %s358
      %v360 = vld [vmem:[%s355] sm:$0xff]
      %v361 = vld [vmem:[%s355 + $0x8] sm:$0xff]
      %v362 = vld [vmem:[%s355 + $0x10] sm:$0xff]
      %v363 = vld [vmem:[%s355 + $0x18] sm:$0xff]
      %v364 = vld [vmem:[%s355 + $0x20] sm:$0xff]
      %v365 = vld [vmem:[%s355 + $0x28] sm:$0xff]
      %v366 = vld [vmem:[%s355 + $0x30] sm:$0xff]
      %v367 = vld [vmem:[%s355 + $0x38] sm:$0xff]
      %v368 = vld [vmem:[%s355 + $0x40] sm:$0xff]
      %v369 = vld [vmem:[%s355 + $0x48] sm:$0xff]
      %v370 = vld [vmem:[%s355 + $0x50] sm:$0xff]
      %v371 = vld [vmem:[%s355 + $0x58] sm:$0xff]
      %v372 = vld [vmem:[%s355 + $0x60] sm:$0xff]
      %v373 = vld [vmem:[%s355 + $0x68] sm:$0xff]
      %v374 = vld [vmem:[%s355 + $0x70] sm:$0xff]
      %v375 = vld [vmem:[%s355 + $0x78] sm:$0xff]
      %v376 = vld [vmem:[%s355 + $0x80] sm:$0xff]
      %v377 = vld [vmem:[%s355 + $0x88] sm:$0xff]
      %v378 = vld [vmem:[%s355 + $0x90] sm:$0xff]
      %v379 = vld [vmem:[%s355 + $0x98] sm:$0xff]
      %v380 = vld [vmem:[%s355 + $0xa0] sm:$0xff]
      %v381 = vld [vmem:[%s355 + $0xa8] sm:$0xff]
      %v382 = vld [vmem:[%s355 + $0xb0] sm:$0xff]
      %v383 = vld [vmem:[%s355 + $0xb8] sm:$0xff]
      %v384 = vld [vmem:[%s355 + $0xc0] sm:$0xff]
      %v385 = vld [vmem:[%s355 + $0xc8] sm:$0xff]
      %v386 = vld [vmem:[%s355 + $0xd0] sm:$0xff]
      %v387 = vld [vmem:[%s355 + $0xd8] sm:$0xff]
      %v388 = vld [vmem:[%s355 + $0xe0] sm:$0xff]
      %v389 = vld [vmem:[%s355 + $0xe8] sm:$0xff]
      %v390 = vld [vmem:[%s355 + $0xf0] sm:$0xff]
      %v391 = vld [vmem:[%s355 + $0xf8] sm:$0xff]
      %v392 = vld [vmem:[%s2] sm:$0xff]
      %v393 = vld [vmem:[%s3] sm:$0xff]
      %395 = vset.pattern.permute.xlu0 0
      %396 = vperm.xlu0 %395, %v393
      %v397 = vpop.permute.xlu0 %396
      %vm399 = vcmask 523264
      %v401 = vsel %vm399, %v392, 0
      %403 = vmatprep.subr.mxu0 %v361
      %404 = vmatpush1.msra.mxu0 %v360
      %405 = vmatprep.subr.mxu0 %v365
      %406 = vmatpush1.msra.mxu0 %v364
      %407 = vmatprep.subr.mxu0 %v369
      %408 = vmatpush1.msra.mxu0 %v368
      %409 = vmatprep.subr.mxu0 %v373
      %410 = vmatpush1.msra.mxu0 %v372
      %411 = vmatprep.subr.mxu0 %v377
      %412 = vmatpush1.msra.mxu0 %v376
      %413 = vmatprep.subr.mxu0 %v381
      %414 = vmatpush1.msra.mxu0 %v380
      %415 = vmatprep.subr.mxu0 %v385
      %416 = vmatpush1.msra.mxu0 %v384
      %417 = vmatprep.subr.mxu0 %v389
      %418 = vmatpush1.msra.mxu0 %v388
      %419 = vmatprep.subr.mxu0 0.0
      %420 = vmatpush1.msra.mxu0 0.0
      %421 = vmatprep.subr.mxu0 0.0
      %422 = vmatpush1.msra.mxu0 0.0
      %423 = vmatprep.subr.mxu0 0.0
      %424 = vmatpush1.msra.mxu0 0.0
      %425 = vmatprep.subr.mxu0 0.0
      %426 = vmatpush1.msra.mxu0 0.0
      %427 = vmatprep.subr.mxu0 0.0
      %428 = vmatpush1.msra.mxu0 0.0
      %429 = vmatprep.subr.mxu0 0.0
      %430 = vmatpush1.msra.mxu0 0.0
      %431 = vmatprep.subr.mxu0 0.0
      %432 = vmatpush1.msra.mxu0 0.0
      %433 = vmatprep.subr.mxu0 0.0
      %434 = vmatpush1.msra.mxu0 0.0
      %435 = vmatprep.subr.mxu0 0.0
      %436 = vmatpush1.msra.mxu0 0.0
      %437 = vmatprep.subr.mxu0 0.0
      %438 = vmatpush1.msra.mxu0 0.0
      %439 = vmatprep.subr.mxu0 0.0
      %440 = vmatpush1.msra.mxu0 0.0
      %441 = vmatprep.subr.mxu0 0.0
      %442 = vmatpush1.msra.mxu0 0.0
      %443 = vmatprep.subr.mxu0 0.0
      %444 = vmatpush1.msra.mxu0 0.0
      %445 = vmatprep.subr.mxu0 0.0
      %446 = vmatpush1.msra.mxu0 0.0
      %447 = vmatprep.subr.mxu0 0.0
      %448 = vmatpush1.msra.mxu0 0.0
      %449 = vmatprep.subr.mxu0 0.0
      %450 = vmatpush1.msra.mxu0 0.0
      %451 = vmatprep.subr.mxu0 0.0
      %452 = vmatpush1.msra.mxu0 0.0
      %453 = vmatprep.subr.mxu0 0.0
      %454 = vmatpush1.msra.mxu0 0.0
      %455 = vmatprep.subr.mxu0 0.0
      %456 = vmatpush1.msra.mxu0 0.0
      %457 = vmatprep.subr.mxu0 0.0
      %458 = vmatpush1.msra.mxu0 0.0
      %459 = vmatprep.subr.mxu0 0.0
      %460 = vmatpush1.msra.mxu0 0.0
      %461 = vmatprep.subr.mxu0 0.0
      %462 = vmatpush1.msra.mxu0 0.0
      %463 = vmatprep.subr.mxu0 0.0
      %464 = vmatpush1.msra.mxu0 0.0
      %465 = vmatprep.subr.mxu0 0.0
      %466 = vmatpush1.msra.mxu0 0.0
      %467 = vmatprep.mubr.f32.mxu0 0.0
      %468 = vmatmul.mubr.f32.gmra.mrb[0].mxu0 %v401
      %v469 = vpop.f32.mrb[0].mxu0
      %v470 = vadd.f32 %v397, %v469
      %v471 = vpop.f32.mrb[0].mxu0
      %v472 = vadd.f32 %v397, %v471
      %473 = vdwg.mxu0
      %474 = vmatprep.subr.mxu0 %v363
      %475 = vmatpush1.msra.mxu0 %v362
      %476 = vmatprep.subr.mxu0 %v367
      %477 = vmatpush1.msra.mxu0 %v366
      %478 = vmatprep.subr.mxu0 %v371
      %479 = vmatpush1.msra.mxu0 %v370
      %480 = vmatprep.subr.mxu0 %v375
      %481 = vmatpush1.msra.mxu0 %v374
      %482 = vmatprep.subr.mxu0 %v379
      %483 = vmatpush1.msra.mxu0 %v378
      %484 = vmatprep.subr.mxu0 %v383
      %485 = vmatpush1.msra.mxu0 %v382
      %486 = vmatprep.subr.mxu0 %v387
      %487 = vmatpush1.msra.mxu0 %v386
      %488 = vmatprep.subr.mxu0 %v391
      %489 = vmatpush1.msra.mxu0 %v390
      %490 = vmatprep.subr.mxu0 0.0
      %491 = vmatpush1.msra.mxu0 0.0
      %492 = vmatprep.subr.mxu0 0.0
      %493 = vmatpush1.msra.mxu0 0.0
      %494 = vmatprep.subr.mxu0 0.0
      %495 = vmatpush1.msra.mxu0 0.0
      %496 = vmatprep.subr.mxu0 0.0
      %497 = vmatpush1.msra.mxu0 0.0
      %498 = vmatprep.subr.mxu0 0.0
      %499 = vmatpush1.msra.mxu0 0.0
      %500 = vmatprep.subr.mxu0 0.0
      %501 = vmatpush1.msra.mxu0 0.0
      %502 = vmatprep.subr.mxu0 0.0
      %503 = vmatpush1.msra.mxu0 0.0
      %504 = vmatprep.subr.mxu0 0.0
      %505 = vmatpush1.msra.mxu0 0.0
      %506 = vmatprep.subr.mxu0 0.0
      %507 = vmatpush1.msra.mxu0 0.0
      %508 = vmatprep.subr.mxu0 0.0
      %509 = vmatpush1.msra.mxu0 0.0
      %510 = vmatprep.subr.mxu0 0.0
      %511 = vmatpush1.msra.mxu0 0.0
      %512 = vmatprep.subr.mxu0 0.0
      %513 = vmatpush1.msra.mxu0 0.0
      %514 = vmatprep.subr.mxu0 0.0
      %515 = vmatpush1.msra.mxu0 0.0
      %516 = vmatprep.subr.mxu0 0.0
      %517 = vmatpush1.msra.mxu0 0.0
      %518 = vmatprep.subr.mxu0 0.0
      %519 = vmatpush1.msra.mxu0 0.0
      %520 = vmatprep.subr.mxu0 0.0
      %521 = vmatpush1.msra.mxu0 0.0
      %522 = vmatprep.subr.mxu0 0.0
      %523 = vmatpush1.msra.mxu0 0.0
      %524 = vmatprep.subr.mxu0 0.0
      %525 = vmatpush1.msra.mxu0 0.0
      %526 = vmatprep.subr.mxu0 0.0
      %527 = vmatpush1.msra.mxu0 0.0
      %528 = vmatprep.subr.mxu0 0.0
      %529 = vmatpush1.msra.mxu0 0.0
      %530 = vmatprep.subr.mxu0 0.0
      %531 = vmatpush1.msra.mxu0 0.0
      %532 = vmatprep.subr.mxu0 0.0
      %533 = vmatpush1.msra.mxu0 0.0
      %534 = vmatprep.subr.mxu0 0.0
      %535 = vmatpush1.msra.mxu0 0.0
      %536 = vmatprep.subr.mxu0 0.0
      %537 = vmatpush1.msra.mxu0 0.0
      %538 = vmatprep.mubr.f32.mxu0 0.0
      %539 = vmatmul.mubr.f32.gmra.mrb[0].mxu0 %v401
      %v540 = vpop.f32.mrb[0].mxu0
      %v541 = vadd.f32 %v397, %v540
      %v542 = vpop.f32.mrb[0].mxu0
      %v543 = vadd.f32 %v397, %v542
      %544 = vdwg.mxu0
      %v545 = vmax.f32 %v470, 0.0
      %v546 = vmax.f32 %v472, 0.0
      %v547 = vmax.f32 %v541, 0.0
      %v548 = vmax.f32 %v543, 0.0
      %549 = vrot.lane.b32.xlu0 %v545, 68
      %v550 = vpop.permute.xlu0 %549
      %551 = vrot.lane.b32.xlu0 %v546, 68
      %v552 = vpop.permute.xlu0 %551
      %553 = vrot.lane.b32.xlu0 %v547, 68
      %v554 = vpop.permute.xlu0 %553
      %555 = vrot.lane.b32.xlu0 %v548, 68
      %v556 = vpop.permute.xlu0 %555
      %v557 = vlaneseq
      %v558 = vand.u32 %v557, 127
      %vm559 = vcmp.lt.s32.totalorder %v558, 68
      %v560 = vsel %vm559, %v554, %v556
      %v561 = vsel %vm559, %v552, %v554
      %v562 = vsel %vm559, %v550, %v552
      %v563 = vsel %vm559, %v556, %v550
      %v564 = vld [vmem:[%s1] sm:$0xff]
      %v565 = vld [vmem:[%s1 + $0x8] sm:$0xff]
      %v566 = vld [vmem:[%s1 + $0x10] sm:$0xff]
      %v567 = vld [vmem:[%s1 + $0x18] sm:$0xff]
      %v568 = vmul.f32 %v563, %v564
      %v569 = vmul.f32 %v562, %v565
      %v570 = vmul.f32 %v561, %v566
      %v571 = vmul.f32 %v560, %v567
      %572 = vrot.lane.b32.xlu0 %v545, 64
      %v573 = vpop.permute.xlu0 %572
      %574 = vrot.lane.b32.xlu0 %v546, 64
      %v575 = vpop.permute.xlu0 %574
      %576 = vrot.lane.b32.xlu0 %v547, 64
      %v577 = vpop.permute.xlu0 %576
      %578 = vrot.lane.b32.xlu0 %v548, 64
      %v579 = vpop.permute.xlu0 %578
      %vm580 = vcmp.lt.s32.totalorder %v558, 64
      %v581 = vsel %vm580, %v577, %v579
      %v582 = vsel %vm580, %v575, %v577
      %v583 = vsel %vm580, %v573, %v575
      %v584 = vsel %vm580, %v579, %v573
      %s585 = scalar_lea.vmem %s1, 32
      %v586 = vld [vmem:[%s585] sm:$0xff]
      %v587 = vld [vmem:[%s585 + $0x8] sm:$0xff]
      %v588 = vld [vmem:[%s585 + $0x10] sm:$0xff]
      %v589 = vld [vmem:[%s585 + $0x18] sm:$0xff]
      %v590 = vmul.f32 %v584, %v586
      %v591 = vmul.f32 %v583, %v587
      %v592 = vmul.f32 %v582, %v588
      %v593 = vmul.f32 %v581, %v589
      %594 = vrot.lane.b32.xlu0 %v545, 60
      %v595 = vpop.permute.xlu0 %594
      %596 = vrot.lane.b32.xlu0 %v546, 60
      %v597 = vpop.permute.xlu0 %596
      %598 = vrot.lane.b32.xlu0 %v547, 60
      %v599 = vpop.permute.xlu0 %598
      %600 = vrot.lane.b32.xlu0 %v548, 60
      %v601 = vpop.permute.xlu0 %600
      %vm602 = vcmp.lt.s32.totalorder %v558, 60
      %v603 = vsel %vm602, %v599, %v601
      %v604 = vsel %vm602, %v597, %v599
      %v605 = vsel %vm602, %v595, %v597
      %v606 = vsel %vm602, %v601, %v595
      %s607 = scalar_lea.vmem %s1, 64
      %v608 = vld [vmem:[%s607] sm:$0xff]
      %v609 = vld [vmem:[%s607 + $0x8] sm:$0xff]
      %v610 = vld [vmem:[%s607 + $0x10] sm:$0xff]
      %v611 = vld [vmem:[%s607 + $0x18] sm:$0xff]
      %v612 = vmul.f32 %v606, %v608
      %v613 = vmul.f32 %v605, %v609
      %v614 = vmul.f32 %v604, %v610
      %v615 = vmul.f32 %v603, %v611
      %616 = vrot.lane.b32.xlu0 %v545, 4
      %v617 = vpop.permute.xlu0 %616
      %618 = vrot.lane.b32.xlu0 %v546, 4
      %v619 = vpop.permute.xlu0 %618
      %620 = vrot.lane.b32.xlu0 %v547, 4
      %v621 = vpop.permute.xlu0 %620
      %622 = vrot.lane.b32.xlu0 %v548, 4
      %v623 = vpop.permute.xlu0 %622
      %vm624 = vcmp.lt.s32.totalorder %v558, 4
      %v625 = vsel %vm624, %v621, %v623
      %v626 = vsel %vm624, %v619, %v621
      %v627 = vsel %vm624, %v617, %v619
      %v628 = vsel %vm624, %v623, %v617
      %s629 = scalar_lea.vmem %s1, 96
      %v630 = vld [vmem:[%s629] sm:$0xff]
      %v631 = vld [vmem:[%s629 + $0x8] sm:$0xff]
      %v632 = vld [vmem:[%s629 + $0x10] sm:$0xff]
      %v633 = vld [vmem:[%s629 + $0x18] sm:$0xff]
      %v634 = vmul.f32 %v628, %v630
      %v635 = vmul.f32 %v627, %v631
      %v636 = vmul.f32 %v626, %v632
      %v637 = vmul.f32 %v625, %v633
      %638 = vrot.lane.b32.xlu0 %v545, 124
      %v639 = vpop.permute.xlu0 %638
      %640 = vrot.lane.b32.xlu0 %v546, 124
      %v641 = vpop.permute.xlu0 %640
      %642 = vrot.lane.b32.xlu0 %v547, 124
      %v643 = vpop.permute.xlu0 %642
      %644 = vrot.lane.b32.xlu0 %v548, 124
      %v645 = vpop.permute.xlu0 %644
      %vm646 = vcmp.lt.s32.totalorder %v558, 124
      %v647 = vsel %vm646, %v643, %v645
      %v648 = vsel %vm646, %v641, %v643
      %v649 = vsel %vm646, %v639, %v641
      %v650 = vsel %vm646, %v645, %v639
      %s651 = scalar_lea.vmem %s1, 160
      %v652 = vld [vmem:[%s651] sm:$0xff]
      %v653 = vld [vmem:[%s651 + $0x8] sm:$0xff]
      %v654 = vld [vmem:[%s651 + $0x10] sm:$0xff]
      %v655 = vld [vmem:[%s651 + $0x18] sm:$0xff]
      %v656 = vmul.f32 %v649, %v652
      %v657 = vmul.f32 %v648, %v653
      %v658 = vmul.f32 %v647, %v654
      %v659 = vmul.f32 %v650, %v655
      %s660 = scalar_lea.vmem %s1, 192
      %v661 = vld [vmem:[%s660] sm:$0xff]
      %v662 = vld [vmem:[%s660 + $0x8] sm:$0xff]
      %v663 = vld [vmem:[%s660 + $0x10] sm:$0xff]
      %v664 = vld [vmem:[%s660 + $0x18] sm:$0xff]
      %v665 = vmul.f32 %v562, %v661
      %v666 = vmul.f32 %v561, %v662
      %v667 = vmul.f32 %v560, %v663
      %v668 = vmul.f32 %v563, %v664
      %s669 = scalar_lea.vmem %s1, 224
      %v670 = vld [vmem:[%s669] sm:$0xff]
      %v671 = vld [vmem:[%s669 + $0x8] sm:$0xff]
      %v672 = vld [vmem:[%s669 + $0x10] sm:$0xff]
      %v673 = vld [vmem:[%s669 + $0x18] sm:$0xff]
      %v674 = vmul.f32 %v583, %v670
      %v675 = vmul.f32 %v582, %v671
      %v676 = vmul.f32 %v581, %v672
      %v677 = vmul.f32 %v584, %v673
      %s678 = scalar_lea.vmem %s1, 256
      %v679 = vld [vmem:[%s678] sm:$0xff]
      %v680 = vld [vmem:[%s678 + $0x8] sm:$0xff]
      %v681 = vld [vmem:[%s678 + $0x10] sm:$0xff]
      %v682 = vld [vmem:[%s678 + $0x18] sm:$0xff]
      %v683 = vmul.f32 %v605, %v679
      %v684 = vmul.f32 %v604, %v680
      %v685 = vmul.f32 %v603, %v681
      %v686 = vmul.f32 %v606, %v682
      %v687 = vld [vmem:[%s4] sm:$0xff]
      %v688 = vld [vmem:[%s5] sm:$0xff]
      %690 = vset.pattern.permute.xlu0 0
      %691 = vperm.xlu0 %690, %v688
      %v692 = vpop.permute.xlu0 %691
      %vm694 = vcmask 588800
      %v696 = vsel %vm694, %v687, 0
      %698 = vmatprep.subr.mxu0 %v569
      %699 = vmatpush1.msra.mxu0 %v568
      %700 = vmatprep.subr.mxu0 %v591
      %701 = vmatpush1.msra.mxu0 %v590
      %702 = vmatprep.subr.mxu0 %v613
      %703 = vmatpush1.msra.mxu0 %v612
      %704 = vmatprep.subr.mxu0 %v635
      %705 = vmatpush1.msra.mxu0 %v634
      %706 = vmatprep.subr.mxu0 %v546
      %707 = vmatpush1.msra.mxu0 %v545
      %708 = vmatprep.subr.mxu0 %v657
      %709 = vmatpush1.msra.mxu0 %v656
      %710 = vmatprep.subr.mxu0 %v666
      %711 = vmatpush1.msra.mxu0 %v665
      %712 = vmatprep.subr.mxu0 %v675
      %713 = vmatpush1.msra.mxu0 %v674
      %714 = vmatprep.subr.mxu0 %v684
      %715 = vmatpush1.msra.mxu0 %v683
      %716 = vmatprep.subr.mxu0 0.0
      %717 = vmatpush1.msra.mxu0 0.0
      %718 = vmatprep.subr.mxu0 0.0
      %719 = vmatpush1.msra.mxu0 0.0
      %720 = vmatprep.subr.mxu0 0.0
      %721 = vmatpush1.msra.mxu0 0.0
      %722 = vmatprep.subr.mxu0 0.0
      %723 = vmatpush1.msra.mxu0 0.0
      %724 = vmatprep.subr.mxu0 0.0
      %725 = vmatpush1.msra.mxu0 0.0
      %726 = vmatprep.subr.mxu0 0.0
      %727 = vmatpush1.msra.mxu0 0.0
      %728 = vmatprep.subr.mxu0 0.0
      %729 = vmatpush1.msra.mxu0 0.0
      %730 = vmatprep.subr.mxu0 0.0
      %731 = vmatpush1.msra.mxu0 0.0
      %732 = vmatprep.subr.mxu0 0.0
      %733 = vmatpush1.msra.mxu0 0.0
      %734 = vmatprep.subr.mxu0 0.0
      %735 = vmatpush1.msra.mxu0 0.0
      %736 = vmatprep.subr.mxu0 0.0
      %737 = vmatpush1.msra.mxu0 0.0
      %738 = vmatprep.subr.mxu0 0.0
      %739 = vmatpush1.msra.mxu0 0.0
      %740 = vmatprep.subr.mxu0 0.0
      %741 = vmatpush1.msra.mxu0 0.0
      %742 = vmatprep.subr.mxu0 0.0
      %743 = vmatpush1.msra.mxu0 0.0
      %744 = vmatprep.subr.mxu0 0.0
      %745 = vmatpush1.msra.mxu0 0.0
      %746 = vmatprep.subr.mxu0 0.0
      %747 = vmatpush1.msra.mxu0 0.0
      %748 = vmatprep.subr.mxu0 0.0
      %749 = vmatpush1.msra.mxu0 0.0
      %750 = vmatprep.subr.mxu0 0.0
      %751 = vmatpush1.msra.mxu0 0.0
      %752 = vmatprep.subr.mxu0 0.0
      %753 = vmatpush1.msra.mxu0 0.0
      %754 = vmatprep.subr.mxu0 0.0
      %755 = vmatpush1.msra.mxu0 0.0
      %756 = vmatprep.subr.mxu0 0.0
      %757 = vmatpush1.msra.mxu0 0.0
      %758 = vmatprep.subr.mxu0 0.0
      %759 = vmatpush1.msra.mxu0 0.0
      %760 = vmatprep.subr.mxu0 0.0
      %761 = vmatpush1.msra.mxu0 0.0
      %762 = vmatprep.mubr.f32.mxu0 0.0
      %763 = vmatmul.mubr.f32.gmra.mrb[0].mxu0 %v696
      %v764 = vpop.f32.mrb[0].mxu0
      %v765 = vadd.f32 %v692, %v764
      %v766 = vpop.f32.mrb[0].mxu0
      %v767 = vadd.f32 %v692, %v766
      %768 = vdwg.mxu0
      %769 = vmatprep.subr.mxu0 %v571
      %770 = vmatpush1.msra.mxu0 %v570
      %771 = vmatprep.subr.mxu0 %v593
      %772 = vmatpush1.msra.mxu0 %v592
      %773 = vmatprep.subr.mxu0 %v615
      %774 = vmatpush1.msra.mxu0 %v614
      %775 = vmatprep.subr.mxu0 %v637
      %776 = vmatpush1.msra.mxu0 %v636
      %777 = vmatprep.subr.mxu0 %v548
      %778 = vmatpush1.msra.mxu0 %v547
      %779 = vmatprep.subr.mxu0 %v659
      %780 = vmatpush1.msra.mxu0 %v658
      %781 = vmatprep.subr.mxu0 %v668
      %782 = vmatpush1.msra.mxu0 %v667
      %783 = vmatprep.subr.mxu0 %v677
      %784 = vmatpush1.msra.mxu0 %v676
      %785 = vmatprep.subr.mxu0 %v686
      %786 = vmatpush1.msra.mxu0 %v685
      %787 = vmatprep.subr.mxu0 0.0
      %788 = vmatpush1.msra.mxu0 0.0
      %789 = vmatprep.subr.mxu0 0.0
      %790 = vmatpush1.msra.mxu0 0.0
      %791 = vmatprep.subr.mxu0 0.0
      %792 = vmatpush1.msra.mxu0 0.0
      %793 = vmatprep.subr.mxu0 0.0
      %794 = vmatpush1.msra.mxu0 0.0
      %795 = vmatprep.subr.mxu0 0.0
      %796 = vmatpush1.msra.mxu0 0.0
      %797 = vmatprep.subr.mxu0 0.0
      %798 = vmatpush1.msra.mxu0 0.0
      %799 = vmatprep.subr.mxu0 0.0
      %800 = vmatpush1.msra.mxu0 0.0
      %801 = vmatprep.subr.mxu0 0.0
      %802 = vmatpush1.msra.mxu0 0.0
      %803 = vmatprep.subr.mxu0 0.0
      %804 = vmatpush1.msra.mxu0 0.0
      %805 = vmatprep.subr.mxu0 0.0
      %806 = vmatpush1.msra.mxu0 0.0
      %807 = vmatprep.subr.mxu0 0.0
      %808 = vmatpush1.msra.mxu0 0.0
      %809 = vmatprep.subr.mxu0 0.0
      %810 = vmatpush1.msra.mxu0 0.0
      %811 = vmatprep.subr.mxu0 0.0
      %812 = vmatpush1.msra.mxu0 0.0
      %813 = vmatprep.subr.mxu0 0.0
      %814 = vmatpush1.msra.mxu0 0.0
      %815 = vmatprep.subr.mxu0 0.0
      %816 = vmatpush1.msra.mxu0 0.0
      %817 = vmatprep.subr.mxu0 0.0
      %818 = vmatpush1.msra.mxu0 0.0
      %819 = vmatprep.subr.mxu0 0.0
      %820 = vmatpush1.msra.mxu0 0.0
      %821 = vmatprep.subr.mxu0 0.0
      %822 = vmatpush1.msra.mxu0 0.0
      %823 = vmatprep.subr.mxu0 0.0
      %824 = vmatpush1.msra.mxu0 0.0
      %825 = vmatprep.subr.mxu0 0.0
      %826 = vmatpush1.msra.mxu0 0.0
      %827 = vmatprep.subr.mxu0 0.0
      %828 = vmatpush1.msra.mxu0 0.0
      %829 = vmatprep.subr.mxu0 0.0
      %830 = vmatpush1.msra.mxu0 0.0
      %831 = vmatprep.subr.mxu0 0.0
      %832 = vmatpush1.msra.mxu0 0.0
      %833 = vmatprep.mubr.f32.mxu0 0.0
      %834 = vmatmul.mubr.f32.gmra.mrb[0].mxu0 %v696
      %v835 = vpop.f32.mrb[0].mxu0
      %v836 = vadd.f32 %v692, %v835
      %v837 = vpop.f32.mrb[0].mxu0
      %v838 = vadd.f32 %v692, %v837
      %839 = vdwg.mxu0
      %v840 = vmax.f32 %v765, 0.0
      %v841 = vmax.f32 %v767, 0.0
      %v842 = vmax.f32 %v836, 0.0
      %v843 = vmax.f32 %v838, 0.0
      %844 = vrot.lane.b32.xlu0 %v840, 68
      %v845 = vpop.permute.xlu0 %844
      %846 = vrot.lane.b32.xlu0 %v841, 68
      %v847 = vpop.permute.xlu0 %846
      %848 = vrot.lane.b32.xlu0 %v842, 68
      %v849 = vpop.permute.xlu0 %848
      %850 = vrot.lane.b32.xlu0 %v843, 68
      %v851 = vpop.permute.xlu0 %850
      %v852 = vsel %vm559, %v849, %v851
      %v853 = vsel %vm559, %v847, %v849
      %v854 = vsel %vm559, %v845, %v847
      %v855 = vsel %vm559, %v851, %v845
      %v856 = vmul.f32 %v855, %v564
      %v857 = vmul.f32 %v854, %v565
      %v858 = vmul.f32 %v853, %v566
      %v859 = vmul.f32 %v852, %v567
      %860 = vrot.lane.b32.xlu0 %v840, 64
      %v861 = vpop.permute.xlu0 %860
      %862 = vrot.lane.b32.xlu0 %v841, 64
      %v863 = vpop.permute.xlu0 %862
      %864 = vrot.lane.b32.xlu0 %v842, 64
      %v865 = vpop.permute.xlu0 %864
      %866 = vrot.lane.b32.xlu0 %v843, 64
      %v867 = vpop.permute.xlu0 %866
      %v868 = vsel %vm580, %v865, %v867
      %v869 = vsel %vm580, %v863, %v865
      %v870 = vsel %vm580, %v861, %v863
      %v871 = vsel %vm580, %v867, %v861
      %v872 = vmul.f32 %v871, %v586
      %v873 = vmul.f32 %v870, %v587
      %v874 = vmul.f32 %v869, %v588
      %v875 = vmul.f32 %v868, %v589
      %876 = vrot.lane.b32.xlu0 %v840, 60
      %v877 = vpop.permute.xlu0 %876
      %878 = vrot.lane.b32.xlu0 %v841, 60
      %v879 = vpop.permute.xlu0 %878
      %880 = vrot.lane.b32.xlu0 %v842, 60
      %v881 = vpop.permute.xlu0 %880
      %882 = vrot.lane.b32.xlu0 %v843, 60
      %v883 = vpop.permute.xlu0 %882
      %v884 = vsel %vm602, %v881, %v883
      %v885 = vsel %vm602, %v879, %v881
      %v886 = vsel %vm602, %v877, %v879
      %v887 = vsel %vm602, %v883, %v877
      %v888 = vmul.f32 %v887, %v608
      %v889 = vmul.f32 %v886, %v609
      %v890 = vmul.f32 %v885, %v610
      %v891 = vmul.f32 %v884, %v611
      %892 = vrot.lane.b32.xlu0 %v840, 4
      %v893 = vpop.permute.xlu0 %892
      %894 = vrot.lane.b32.xlu0 %v841, 4
      %v895 = vpop.permute.xlu0 %894
      %896 = vrot.lane.b32.xlu0 %v842, 4
      %v897 = vpop.permute.xlu0 %896
      %898 = vrot.lane.b32.xlu0 %v843, 4
      %v899 = vpop.permute.xlu0 %898
      %v900 = vsel %vm624, %v897, %v899
      %v901 = vsel %vm624, %v895, %v897
      %v902 = vsel %vm624, %v893, %v895
      %v903 = vsel %vm624, %v899, %v893
      %v904 = vmul.f32 %v903, %v630
      %v905 = vmul.f32 %v902, %v631
      %v906 = vmul.f32 %v901, %v632
      %v907 = vmul.f32 %v900, %v633
      %908 = vrot.lane.b32.xlu0 %v840, 124
      %v909 = vpop.permute.xlu0 %908
      %910 = vrot.lane.b32.xlu0 %v841, 124
      %v911 = vpop.permute.xlu0 %910
      %912 = vrot.lane.b32.xlu0 %v842, 124
      %v913 = vpop.permute.xlu0 %912
      %914 = vrot.lane.b32.xlu0 %v843, 124
      %v915 = vpop.permute.xlu0 %914
      %v916 = vsel %vm646, %v913, %v915
      %v917 = vsel %vm646, %v911, %v913
      %v918 = vsel %vm646, %v909, %v911
      %v919 = vsel %vm646, %v915, %v909
      %v920 = vmul.f32 %v918, %v652
      %v921 = vmul.f32 %v917, %v653
      %v922 = vmul.f32 %v916, %v654
      %v923 = vmul.f32 %v919, %v655
      %v924 = vmul.f32 %v854, %v661
      %v925 = vmul.f32 %v853, %v662
      %v926 = vmul.f32 %v852, %v663
      %v927 = vmul.f32 %v855, %v664
      %v928 = vmul.f32 %v870, %v670
      %v929 = vmul.f32 %v869, %v671
      %v930 = vmul.f32 %v868, %v672
      %v931 = vmul.f32 %v871, %v673
      %v932 = vmul.f32 %v886, %v679
      %v933 = vmul.f32 %v885, %v680
      %v934 = vmul.f32 %v884, %v681
      %v935 = vmul.f32 %v887, %v682
      %v936 = vld [vmem:[%s6] sm:$0xff]
      %v937 = vld [vmem:[%s7] sm:$0xff]
      %939 = vset.pattern.permute.xlu0 0
      %940 = vperm.xlu0 %939, %v937
      %v941 = vpop.permute.xlu0 %940
      %v944 = vsel %vm694, %v936, 0
      %946 = vmatprep.subr.mxu0 %v857
      %947 = vmatpush1.msra.mxu0 %v856
      %948 = vmatprep.subr.mxu0 %v873
      %949 = vmatpush1.msra.mxu0 %v872
      %950 = vmatprep.subr.mxu0 %v889
      %951 = vmatpush1.msra.mxu0 %v888
      %952 = vmatprep.subr.mxu0 %v905
      %953 = vmatpush1.msra.mxu0 %v904
      %954 = vmatprep.subr.mxu0 %v841
      %955 = vmatpush1.msra.mxu0 %v840
      %956 = vmatprep.subr.mxu0 %v921
      %957 = vmatpush1.msra.mxu0 %v920
      %958 = vmatprep.subr.mxu0 %v925
      %959 = vmatpush1.msra.mxu0 %v924
      %960 = vmatprep.subr.mxu0 %v929
      %961 = vmatpush1.msra.mxu0 %v928
      %962 = vmatprep.subr.mxu0 %v933
      %963 = vmatpush1.msra.mxu0 %v932
      %964 = vmatprep.subr.mxu0 0.0
      %965 = vmatpush1.msra.mxu0 0.0
      %966 = vmatprep.subr.mxu0 0.0
      %967 = vmatpush1.msra.mxu0 0.0
      %968 = vmatprep.subr.mxu0 0.0
      %969 = vmatpush1.msra.mxu0 0.0
      %970 = vmatprep.subr.mxu0 0.0
      %971 = vmatpush1.msra.mxu0 0.0
      %972 = vmatprep.subr.mxu0 0.0
      %973 = vmatpush1.msra.mxu0 0.0
      %974 = vmatprep.subr.mxu0 0.0
      %975 = vmatpush1.msra.mxu0 0.0
      %976 = vmatprep.subr.mxu0 0.0
      %977 = vmatpush1.msra.mxu0 0.0
      %978 = vmatprep.subr.mxu0 0.0
      %979 = vmatpush1.msra.mxu0 0.0
      %980 = vmatprep.subr.mxu0 0.0
      %981 = vmatpush1.msra.mxu0 0.0
      %982 = vmatprep.subr.mxu0 0.0
      %983 = vmatpush1.msra.mxu0 0.0
      %984 = vmatprep.subr.mxu0 0.0
      %985 = vmatpush1.msra.mxu0 0.0
      %986 = vmatprep.subr.mxu0 0.0
      %987 = vmatpush1.msra.mxu0 0.0
      %988 = vmatprep.subr.mxu0 0.0
      %989 = vmatpush1.msra.mxu0 0.0
      %990 = vmatprep.subr.mxu0 0.0
      %991 = vmatpush1.msra.mxu0 0.0
      %992 = vmatprep.subr.mxu0 0.0
      %993 = vmatpush1.msra.mxu0 0.0
      %994 = vmatprep.subr.mxu0 0.0
      %995 = vmatpush1.msra.mxu0 0.0
      %996 = vmatprep.subr.mxu0 0.0
      %997 = vmatpush1.msra.mxu0 0.0
      %998 = vmatprep.subr.mxu0 0.0
      %999 = vmatpush1.msra.mxu0 0.0
      %1000 = vmatprep.subr.mxu0 0.0
      %1001 = vmatpush1.msra.mxu0 0.0
      %1002 = vmatprep.subr.mxu0 0.0
      %1003 = vmatpush1.msra.mxu0 0.0
      %1004 = vmatprep.subr.mxu0 0.0
      %1005 = vmatpush1.msra.mxu0 0.0
      %1006 = vmatprep.subr.mxu0 0.0
      %1007 = vmatpush1.msra.mxu0 0.0
      %1008 = vmatprep.subr.mxu0 0.0
      %1009 = vmatpush1.msra.mxu0 0.0
      %1010 = vmatprep.mubr.f32.mxu0 0.0
      %1011 = vmatmul.mubr.f32.gmra.mrb[0].mxu0 %v944
      %v1012 = vpop.f32.mrb[0].mxu0
      %v1013 = vadd.f32 %v941, %v1012
      %v1014 = vpop.f32.mrb[0].mxu0
      %v1015 = vadd.f32 %v941, %v1014
      %1016 = vdwg.mxu0
      %1017 = vmatprep.subr.mxu0 %v859
      %1018 = vmatpush1.msra.mxu0 %v858
      %1019 = vmatprep.subr.mxu0 %v875
      %1020 = vmatpush1.msra.mxu0 %v874
      %1021 = vmatprep.subr.mxu0 %v891
      %1022 = vmatpush1.msra.mxu0 %v890
      %1023 = vmatprep.subr.mxu0 %v907
      %1024 = vmatpush1.msra.mxu0 %v906
      %1025 = vmatprep.subr.mxu0 %v843
      %1026 = vmatpush1.msra.mxu0 %v842
      %1027 = vmatprep.subr.mxu0 %v923
      %1028 = vmatpush1.msra.mxu0 %v922
      %1029 = vmatprep.subr.mxu0 %v927
      %1030 = vmatpush1.msra.mxu0 %v926
      %1031 = vmatprep.subr.mxu0 %v931
      %1032 = vmatpush1.msra.mxu0 %v930
      %1033 = vmatprep.subr.mxu0 %v935
      %1034 = vmatpush1.msra.mxu0 %v934
      %1035 = vmatprep.subr.mxu0 0.0
      %1036 = vmatpush1.msra.mxu0 0.0
      %1037 = vmatprep.subr.mxu0 0.0
      %1038 = vmatpush1.msra.mxu0 0.0
      %1039 = vmatprep.subr.mxu0 0.0
      %1040 = vmatpush1.msra.mxu0 0.0
      %1041 = vmatprep.subr.mxu0 0.0
      %1042 = vmatpush1.msra.mxu0 0.0
      %1043 = vmatprep.subr.mxu0 0.0
      %1044 = vmatpush1.msra.mxu0 0.0
      %1045 = vmatprep.subr.mxu0 0.0
      %1046 = vmatpush1.msra.mxu0 0.0
      %1047 = vmatprep.subr.mxu0 0.0
      %1048 = vmatpush1.msra.mxu0 0.0
      %1049 = vmatprep.subr.mxu0 0.0
      %1050 = vmatpush1.msra.mxu0 0.0
      %1051 = vmatprep.subr.mxu0 0.0
      %1052 = vmatpush1.msra.mxu0 0.0
      %1053 = vmatprep.subr.mxu0 0.0
      %1054 = vmatpush1.msra.mxu0 0.0
      %1055 = vmatprep.subr.mxu0 0.0
      %1056 = vmatpush1.msra.mxu0 0.0
      %1057 = vmatprep.subr.mxu0 0.0
      %1058 = vmatpush1.msra.mxu0 0.0
      %1059 = vmatprep.subr.mxu0 0.0
      %1060 = vmatpush1.msra.mxu0 0.0
      %1061 = vmatprep.subr.mxu0 0.0
      %1062 = vmatpush1.msra.mxu0 0.0
      %1063 = vmatprep.subr.mxu0 0.0
      %1064 = vmatpush1.msra.mxu0 0.0
      %1065 = vmatprep.subr.mxu0 0.0
      %1066 = vmatpush1.msra.mxu0 0.0
      %1067 = vmatprep.subr.mxu0 0.0
      %1068 = vmatpush1.msra.mxu0 0.0
      %1069 = vmatprep.subr.mxu0 0.0
      %1070 = vmatpush1.msra.mxu0 0.0
      %1071 = vmatprep.subr.mxu0 0.0
      %1072 = vmatpush1.msra.mxu0 0.0
      %1073 = vmatprep.subr.mxu0 0.0
      %1074 = vmatpush1.msra.mxu0 0.0
      %1075 = vmatprep.subr.mxu0 0.0
      %1076 = vmatpush1.msra.mxu0 0.0
      %1077 = vmatprep.subr.mxu0 0.0
      %1078 = vmatpush1.msra.mxu0 0.0
      %1079 = vmatprep.subr.mxu0 0.0
      %1080 = vmatpush1.msra.mxu0 0.0
      %1081 = vmatprep.mubr.f32.mxu0 0.0
      %1082 = vmatmul.mubr.f32.gmra.mrb[0].mxu0 %v944
      %v1083 = vpop.f32.mrb[0].mxu0
      %v1084 = vadd.f32 %v941, %v1083
      %v1085 = vpop.f32.mrb[0].mxu0
      %v1086 = vadd.f32 %v941, %v1085
      %1087 = vdwg.mxu0
      %v1088 = vmax.f32 %v1013, 0.0
      %v1089 = vmax.f32 %v1015, 0.0
      %v1090 = vmax.f32 %v1084, 0.0
      %v1091 = vmax.f32 %v1086, 0.0
      %v1092 = vld [vmem:[%s8] sm:$0xff]
      %1094 = vset.pattern.permute.xlu0 0
      %1095 = vperm.xlu0 %1094, %v1092
      %v1096 = vpop.permute.xlu0 %1095
      %v1098 = vmul.f32 %v1096, %v1088
      %v1099 = vmul.f32 %v1096, %v1089
      %v1100 = vmul.f32 %v1096, %v1090
      %v1101 = vmul.f32 %v1096, %v1091
      %v1102 = vrot.slane %v1098, 4
      %v1103 = vadd.f32 %v1098, %v1102
      %v1104 = vrot.slane %v1103, 2
      %v1105 = vadd.f32 %v1103, %v1104
      %v1106 = vrot.slane %v1105, 1
      %v1107 = vadd.f32 %v1105, %v1106
      %v1108 = vrot.slane %v1099, 4
      %v1109 = vadd.f32 %v1099, %v1108
      %v1110 = vrot.slane %v1109, 2
      %v1111 = vadd.f32 %v1109, %v1110
      %v1112 = vrot.slane %v1111, 1
      %v1113 = vadd.f32 %v1111, %v1112
      %v1114 = vrot.slane %v1100, 4
      %v1115 = vadd.f32 %v1100, %v1114
      %v1116 = vrot.slane %v1115, 2
      %v1117 = vadd.f32 %v1115, %v1116
      %v1118 = vrot.slane %v1117, 1
      %v1119 = vadd.f32 %v1117, %v1118
      %v1120 = vrot.slane %v1101, 4
      %v1121 = vadd.f32 %v1101, %v1120
      %v1122 = vrot.slane %v1121, 2
      %v1123 = vadd.f32 %v1121, %v1122
      %v1124 = vrot.slane %v1123, 1
      %v1125 = vadd.f32 %v1123, %v1124
      %v1126 = vld [vmem:[#allocation2] sm:$0x1]
      %1128 = vset.pattern.permute.xlu0 0
      %1129 = vperm.xlu0 %1128, %v1126
      %v1130 = vpop.permute.xlu0 %1129
      %v1132 = vlaneseq
      %v1133 = vshrl.u32 %v1132, 7
      %v1134 = vsub.s32 0, %v1133
      %v1135 = vrot.slane %v1130, %v1134
      %v1136 = vadd.f32 %v1107, %v1135
      %v1137 = vadd.f32 %v1113, %v1135
      %v1138 = vadd.f32 %v1119, %v1135
      %v1139 = vadd.f32 %v1125, %v1135
      %v1144 = vcombine.low %v1136, %v1137
      %v1145 = vcombine.low %v1138, %v1139
      %v1147 = vunpack.c.l.s4 1966171168
      %v1148 = vunpack.c.0.s8 %v1147
      %v1149 = vlaneseq
      %v1150 = vshrl.u32 %v1149, 7
      %v1151 = vsub.s32 %v1148, %v1150
      %v1152 = vrot.slane %v1144, %v1151
      %v1154 = vunpack.c.l.s4 1966171168
      %v1155 = vunpack.c.0.s8 %v1154
      %v1156 = vlaneseq
      %v1157 = vshrl.u32 %v1156, 7
      %v1158 = vsub.s32 %v1155, %v1157
      %v1159 = vrot.slane %v1145, %v1158
      %v1160 = vcombine.low %v1152, %v1159
      %v1162 = vunpack.c.l.s4 1966171168
      %v1163 = vunpack.c.0.s8 %v1162
      %v1164 = vlaneseq
      %v1165 = vshrl.u32 %v1164, 7
      %v1166 = vsub.s32 %v1163, %v1165
      %v1167 = vrot.slane %v1160, %v1166
      %v1169 = vlaneseq
      %vm1170 = vcmp.ge.s32.totalorder %v1169, 0
      %vm1171 = vcmp.lt.s32.totalorder %v1169, 512
      %vm1172 = vmand %vm1170, %vm1171
      %1173 = vst.msk [vmem:[%s359] sm:$0xf] %vm1172, %v1167
      %p1174 = scmp.lt.s32.totalorder %s23, 1
      %s1175 = scalar_select %p1174, %s23, 1
      %s1176 = smul.addr %s1175, 4
      %s1177 = scalar_lea.vmem %s10, %s1176
      // Predicated region
      $region61: #{spatial_gate_pallas.1} parent=59 // pred_check
        %p1178 = pneg %p256
      $region62: #{spatial_gate_pallas.1} parent=59 // pred_check_branch
        %1180 = sbr.rel (%p1178) target = $region64
      $region63: #{spatial_gate_pallas.1} parent=59 // pred_region
        _
      $region64: #{spatial_gate_pallas.1} parent=59 // pred_fallthru
        _
    $region60: #{spatial_gate_pallas.1} parent=5 // pred_fallthru
      _
    %p1181 = scmp.le.s32.totalorder 2, %s18
    // Predicated region
    $region65: #{spatial_gate_pallas.1} parent=5 // pred_check
      %p1182 = pneg %p1181
    $region66: #{spatial_gate_pallas.1} parent=5 // pred_check_branch
      %1184 = sbr.rel (%p1182) target = $region68
    $region67: #{spatial_gate_pallas.1} parent=5 // pred_region
      %s1185 = ssub.s32 %s18, 2
      // Predicated region
      $region69: #{spatial_gate_pallas.1} parent=67 // pred_check
        %p1186 = pneg %p262
      $region70: #{spatial_gate_pallas.1} parent=67 // pred_check_branch
        %1188 = sbr.rel (%p1186) target = $region72
      $region71: #{spatial_gate_pallas.1} parent=67 // pred_region
        %p1189 = scmp.lt.s32.totalorder %s24, 1
        %s1190 = scalar_select %p1189, %s24, 1
        %s1191 = smul.addr %s1190, 4
        %s1192 = scalar_lea.vmem %s10, %s1191
      $region72: #{spatial_gate_pallas.1} parent=67 // pred_fallthru
        _
    $region68: #{spatial_gate_pallas.1} parent=5 // pred_fallthru
      _
  $region6: #{spatial_gate_pallas.1} parent=0 // loop_footer
    %s22 = sadd.s32 1, %s18
  $region7: #{spatial_gate_pallas.1} parent=0 // loop_footer_branch
    %17 = sbr.rel target = $region3
  $region8: #{spatial_gate_pallas.1} parent=0 // loop_exit
    _

</llo_original>
